<compile_context>
chip_gen: v7x
topology: tpu7x:2x2x1
jax: 0.10.0
libtpu: 0.0.40
codegen_flags: <defaults>
</compile_context>

<pallas_src>
import functools

import numpy as np
import jax
import jax.numpy as jnp
from jax import lax
from jax.experimental import pallas as pl
from jax.experimental.pallas import tpu as pltpu

BASE_TEMP = 0.5
EPSILON = 1e-6
LOG_NEG_LOG_EPS = float(np.log(-np.log(EPSILON)))  # log(-log(eps))
NEG_BIG = -1e30


def _round_up(a, b):
    return (a + b - 1) // b * b


# ---------------------------------------------------------------------------
# Shared per-tile compute: head-packed projection, folded Ada-Temp, scaled
# Rep-Slice logits, row-validity mask for the padded point axis.
# ---------------------------------------------------------------------------
def _project_and_scale(x16, wx_ref, bx_ref, wsa_ref, bsa_ref, exp_ref, nt,
                       *, HG_pad, TN, N):
    # head-packed input projection: bf16 operands, f32 accumulation
    xp = jnp.dot(x16, wx_ref[...], preferred_element_type=jnp.float32) + bx_ref[...]
    xp16 = xp.astype(jnp.bfloat16)                                    # (TN, HDh)
    # folded slice-logit + Ada-Temp matmul against block-diagonal weights; the
    # slice bias already carries the -log(-log eps) shift.
    sa = jnp.dot(xp16, wsa_ref[...], preferred_element_type=jnp.float32) + bsa_ref[...]
    logits = sa[:, :HG_pad]                                           # (TN, HG_pad)
    ada = sa[:, HG_pad:]                                              # (TN, H)
    # Ada-Temp: base_temp + clamp(linear(x_proj), -0.4, 0.4); exact reciprocal
    temp = BASE_TEMP + jnp.clip(ada, -0.4, 0.4)
    inv_temp = pl.reciprocal(temp)
    # broadcast per-head inv_temp onto the H*G lane layout (tiny K=H f32 matmul)
    inv_full = jnp.dot(inv_temp, exp_ref[...], preferred_element_type=jnp.float32)
    scaled = logits * inv_full                                        # (TN, HG_pad)
    # mask point-axis padding rows
    rows = lax.broadcasted_iota(jnp.int32, scaled.shape, 0) + nt * TN
    valid = rows < N
    scaled = jnp.where(valid, scaled, NEG_BIG)
    return xp16, scaled, valid


# ---------------------------------------------------------------------------
# Pass 1: online softmax over the point axis N + eidetic-state accumulation.
# Emits per batch: running max m, denominator d, and the fused deslice+to_out
# table wproc = ((eid / (norm+1e-5)) @ Wo_h) packed as (H*G, Dout).
# ---------------------------------------------------------------------------
def _pass1_kernel(x_ref, wx_ref, bx_ref, wsa_ref, bsa_ref, exp_ref, mask_ref, wo_ref,
                  m_ref, d_ref, wproc_ref, m_scr, d_scr, acc_scr,
                  *, HG_pad, TN, N):
    nt = pl.program_id(1)

    @pl.when(nt == 0)
    def _():
        m_scr[...] = jnp.full_like(m_scr, NEG_BIG)
        d_scr[...] = jnp.zeros_like(d_scr)
        acc_scr[...] = jnp.zeros_like(acc_scr)

    xp16, scaled, valid = _project_and_scale(
        x_ref[0], wx_ref, bx_ref, wsa_ref, bsa_ref, exp_ref, nt,
        HG_pad=HG_pad, TN=TN, N=N)

    # online softmax over the point axis (torch.softmax(..., dim=2))
    m_old = m_scr[...]
    m_new = jnp.maximum(m_old, jnp.max(scaled, axis=0, keepdims=True))   # (1, HG_pad)
    alpha = jnp.exp(m_old - m_new)
    e = jnp.where(valid, jnp.exp(scaled - m_new), 0.0)                    # (TN, HG_pad)
    d_scr[...] = alpha * d_scr[...] + jnp.sum(e, axis=0, keepdims=True)
    # eidetic accumulator kept transposed (HDh, HG_pad): the online rescale by
    # alpha is a natural lane broadcast (column scale), no vreg transpose per tile
    acc_scr[...] = alpha * acc_scr[...] + lax.dot_general(
        xp16, e.astype(jnp.bfloat16), (((0,), (0,)), ((), ())),
        preferred_element_type=jnp.float32)
    m_scr[...] = m_new

    @pl.when(nt == pl.num_programs(1) - 1)
    def _():
        # slice_norm (= softmax sum over N) is 1; keep the reference's (norm + 1e-5)
        inv_norm = pl.reciprocal(d_scr[...] * (1.0 + 1e-5))               # (1, HG_pad)
        eid_t = acc_scr[...] * inv_norm * mask_ref[...]                    # (HDh, HG_pad)
        # TODO(synk): Erwin hierarchical processing of the eidetic states is an
        # identity passthrough here (sub-module source not provided).
        wproc = lax.dot_general(eid_t.astype(jnp.bfloat16), wo_ref[...],
                                (((0,), (0,)), ((), ())),
                                preferred_element_type=jnp.float32)        # (HG_pad, Dout_pad)
        wproc_ref[0] = wproc.astype(wproc_ref.dtype)
        m_ref[0] = m_scr[...]
        d_ref[0] = d_scr[...]


# ---------------------------------------------------------------------------
# Pass 2: recompute slice weights per tile with the final (m, d) statistics and
# emit lane-dense output tiles: out = sw @ wproc + bias  (+ optional bf16 sw).
# ---------------------------------------------------------------------------
def _pass2_kernel(x_ref, wx_ref, bx_ref, wsa_ref, bsa_ref, exp_ref, m_ref, d_ref,
                  wp_ref, bo_ref, *out_refs, HG_pad, TN, N):
    o_ref = out_refs[0]
    sw_ref = out_refs[1] if len(out_refs) > 1 else None
    nt = pl.program_id(1)

    _, scaled, valid = _project_and_scale(
        x_ref[0], wx_ref, bx_ref, wsa_ref, bsa_ref, exp_ref, nt,
        HG_pad=HG_pad, TN=TN, N=N)

    e = jnp.where(valid, jnp.exp(scaled - m_ref[0]), 0.0)                 # (TN, HG_pad)
    sw = e * pl.reciprocal(d_ref[0])          # exact reciprocal of the softmax denom
    out = jnp.dot(sw.astype(jnp.bfloat16), wp_ref[0],
                  preferred_element_type=jnp.float32) + bo_ref[...]
    o_ref[0] = out.astype(o_ref.dtype)
    if sw_ref is not None:
        sw_ref[0] = sw.astype(sw_ref.dtype)


# ---------------------------------------------------------------------------
# Full forward: parameter repacking / padding glue in plain JAX + the two calls.
# ---------------------------------------------------------------------------
def erwin_transolver_forward(x, params, heads, dim_head, slice_num,
                             n_tile=512, return_slice_weights=True):
    Wx, bx, Ws, bs, Wa, ba, Wo, bo = params
    B, N, C = x.shape
    H, Dh, G = heads, dim_head, slice_num
    HDh, HG = H * Dh, H * G
    HG_pad = _round_up(HG, 128)
    Dout = C
    Dout_pad = _round_up(Dout, 128)
    saw = HG_pad + H

    # ---- weight repacking (folded, lane-padded, bf16 MXU operands) ----------
    eye = jnp.eye(H, dtype=jnp.float32)
    wx2 = Wx.T.astype(jnp.bfloat16)                                     # (C, HDh)
    bx2 = bx.reshape(1, HDh).astype(jnp.float32)
    w_slice = jnp.pad(jnp.kron(eye, Ws.T), ((0, 0), (0, HG_pad - HG)))  # (HDh, HG_pad)
    w_ada = jnp.kron(eye, Wa.T)                                         # (HDh, H)
    wsa = jnp.concatenate([w_slice, w_ada], axis=1).astype(jnp.bfloat16)
    b_slice = jnp.pad(jnp.tile(bs, H) - LOG_NEG_LOG_EPS, (0, HG_pad - HG))
    b_ada = jnp.tile(ba, H)
    bsa = jnp.concatenate([b_slice, b_ada]).reshape(1, saw).astype(jnp.float32)
    expander = jnp.pad(jnp.kron(eye, jnp.ones((1, G), jnp.float32)),
                       ((0, 0), (0, HG_pad - HG)))                      # (H, HG_pad)
    blockmask = jnp.pad(jnp.kron(eye, jnp.ones((Dh, G), jnp.float32)),
                        ((0, 0), (0, HG_pad - HG)))                     # (HDh, HG_pad)
    woT = jnp.pad(Wo.T, ((0, 0), (0, Dout_pad - Dout))).astype(jnp.bfloat16)
    bo2 = jnp.pad(bo, (0, Dout_pad - Dout)).reshape(1, Dout_pad).astype(jnp.float32)

    # ---- N tiling (sublane-16 aligned for bf16 inputs/outputs) ---------------
    TN = _round_up(min(n_tile, _round_up(N, 16)), 16)
    NT = pl.cdiv(N, TN)
    N_pad = NT * TN
    x16 = jnp.pad(x, ((0, 0), (0, N_pad - N), (0, 0))).astype(jnp.bfloat16)

    weight_specs = [
        pl.BlockSpec((C, HDh), lambda b, t: (0, 0)),
        pl.BlockSpec((1, HDh), lambda b, t: (0, 0)),
        pl.BlockSpec((HDh, saw), lambda b, t: (0, 0)),
        pl.BlockSpec((1, saw), lambda b, t: (0, 0)),
        pl.BlockSpec((H, HG_pad), lambda b, t: (0, 0)),
    ]
    x_spec = pl.BlockSpec((1, TN, C), lambda b, t: (b, t, 0))

    proj_flops = 2 * C * HDh + 2 * HDh * saw + 2 * H * HG_pad           # per row

    # ---------------------------- pass 1 --------------------------------------
    kernel1 = functools.partial(_pass1_kernel, HG_pad=HG_pad, TN=TN, N=N)
    m_f, d_f, wproc = pl.pallas_call(
        kernel1,
        out_shape=(jax.ShapeDtypeStruct((B, 1, HG_pad), jnp.float32),
                   jax.ShapeDtypeStruct((B, 1, HG_pad), jnp.float32),
                   jax.ShapeDtypeStruct((B, HG_pad, Dout_pad), jnp.bfloat16)),
        grid_spec=pltpu.PrefetchScalarGridSpec(
            num_scalar_prefetch=0,
            grid=(B, NT),
            in_specs=[x_spec] + weight_specs + [
                pl.BlockSpec((HDh, HG_pad), lambda b, t: (0, 0)),
                pl.BlockSpec((HDh, Dout_pad), lambda b, t: (0, 0)),
            ],
            out_specs=[
                pl.BlockSpec((1, 1, HG_pad), lambda b, t: (b, 0, 0)),
                pl.BlockSpec((1, 1, HG_pad), lambda b, t: (b, 0, 0)),
                pl.BlockSpec((1, HG_pad, Dout_pad), lambda b, t: (b, 0, 0)),
            ],
            scratch_shapes=[pltpu.VMEM((1, HG_pad), jnp.float32),
                            pltpu.VMEM((1, HG_pad), jnp.float32),
                            pltpu.VMEM((HDh, HG_pad), jnp.float32)],
        ),
        compiler_params=pltpu.CompilerParams(
            dimension_semantics=("parallel", "arbitrary"),
            vmem_limit_bytes=48 * 1024 * 1024),
        cost_estimate=pl.CostEstimate(
            flops=int(B * N_pad * (proj_flops + 2 * HDh * HG_pad)
                      + B * 2 * HDh * HG_pad * Dout_pad),
            transcendentals=int(B * N_pad * (HG_pad + H) + B * NT * HG_pad),
            bytes_accessed=int(B * N_pad * C * 2
                               + (C * HDh + HDh * saw + HDh * Dout_pad) * 2
                               + (H + HDh) * HG_pad * 4
                               + B * HG_pad * (8 + Dout_pad * 2))),
    )(x16, wx2, bx2, wsa, bsa, expander, blockmask, woT)

    # ---------------------------- pass 2 --------------------------------------
    kernel2 = functools.partial(_pass2_kernel, HG_pad=HG_pad, TN=TN, N=N)
    out_spec = pl.BlockSpec((1, TN, Dout_pad), lambda b, t: (b, t, 0))
    if return_slice_weights:
        out_shape = (jax.ShapeDtypeStruct((B, N_pad, Dout_pad), jnp.float32),
                     jax.ShapeDtypeStruct((B, N_pad, HG_pad), jnp.bfloat16))
        out_specs = [out_spec, pl.BlockSpec((1, TN, HG_pad), lambda b, t: (b, t, 0))]
    else:
        out_shape = jax.ShapeDtypeStruct((B, N_pad, Dout_pad), jnp.float32)
        out_specs = out_spec
    result = pl.pallas_call(
        kernel2,
        out_shape=out_shape,
        grid_spec=pltpu.PrefetchScalarGridSpec(
            num_scalar_prefetch=0,
            grid=(B, NT),
            in_specs=[x_spec] + weight_specs + [
                pl.BlockSpec((1, 1, HG_pad), lambda b, t: (b, 0, 0)),
                pl.BlockSpec((1, 1, HG_pad), lambda b, t: (b, 0, 0)),
                pl.BlockSpec((1, HG_pad, Dout_pad), lambda b, t: (b, 0, 0)),
                pl.BlockSpec((1, Dout_pad), lambda b, t: (0, 0)),
            ],
            out_specs=out_specs,
        ),
        compiler_params=pltpu.CompilerParams(
            dimension_semantics=("parallel", "parallel"),
            vmem_limit_bytes=48 * 1024 * 1024),
        cost_estimate=pl.CostEstimate(
            flops=int(B * N_pad * (proj_flops + 2 * HG_pad * Dout_pad)),
            transcendentals=int(B * N_pad * (HG_pad + H)),
            bytes_accessed=int(B * N_pad * C * 2 + (C * HDh + HDh * saw) * 2
                               + H * HG_pad * 4
                               + B * HG_pad * (8 + Dout_pad * 2)
                               + B * N_pad * Dout_pad * 4
                               + (B * N_pad * HG_pad * 2 if return_slice_weights else 0))),
    )(x16, wx2, bx2, wsa, bsa, expander, m_f, d_f, wproc, bo2)

    if return_slice_weights:
        out_pad, sw_pad = result
        out = out_pad[:, :N, :Dout]
        slice_weights = (sw_pad[:, :N, :HG].astype(jnp.float32)
                         .reshape(B, N, H, G).transpose(0, 2, 1, 3))     # (B, H, N, G)
        return out, slice_weights
    return result[:, :N, :Dout]


# ---------------------------------------------------------------------------
# Pure-JAX f32 reference (same semantics as the torch module, Erwin == identity)
# ---------------------------------------------------------------------------
def reference_forward(x, params, heads, dim_head, slice_num):
    Wx, bx, Ws, bs, Wa, ba, Wo, bo = params
    B, N, C = x.shape
    H, Dh, G = heads, dim_head, slice_num
    xp = (x @ Wx.T + bx).reshape(B, N, H, Dh).transpose(0, 2, 1, 3)      # (B,H,N,Dh)
    temp = BASE_TEMP + jnp.clip(xp @ Wa.T + ba, -0.4, 0.4)               # (B,H,N,1)
    logits = xp @ Ws.T + bs - LOG_NEG_LOG_EPS                            # (B,H,N,G)
    sw = jax.nn.softmax(logits / temp, axis=2)
    norm = sw.sum(axis=2, keepdims=True)                                 # (B,H,1,G)
    eid = jnp.einsum('bhnc,bhng->bhgc', xp, sw)
    eid = eid / (jnp.swapaxes(norm, -1, -2) + 1e-5)
    proc = eid                                                           # identity Erwin
    out = jnp.einsum('bhgc,bhng->bhnc', proc, sw)
    out = out.transpose(0, 2, 1, 3).reshape(B, N, H * Dh)
    return out @ Wo.T + bo


if __name__ == "__main__":
    B, N, DIM = 2, 20, 8
    HEADS, DIM_HEAD, SLICE_NUM = 2, 16, 8
    INNER = HEADS * DIM_HEAD

    key = jax.random.PRNGKey(0)
    ks = jax.random.split(key, 9)

    # deterministic parameters (PyTorch Linear convention: weight is (out, in))
    Wx = jax.random.normal(ks[0], (INNER, DIM), jnp.float32) * 0.1
    bx = jax.random.normal(ks[1], (INNER,), jnp.float32) * 0.1
    q, _ = jnp.linalg.qr(jax.random.normal(ks[2], (DIM_HEAD, SLICE_NUM), jnp.float32))
    Ws = q.T.astype(jnp.float32)                       # orthonormal-ish (SLICE_NUM, DIM_HEAD)
    bs = jax.random.normal(ks[3], (SLICE_NUM,), jnp.float32) * 0.1
    Wa = jax.random.normal(ks[4], (1, DIM_HEAD), jnp.float32) * 0.1
    ba = jax.random.normal(ks[5], (1,), jnp.float32) * 0.1
    Wo = jax.random.normal(ks[6], (DIM, INNER), jnp.float32) * 0.1
    bo = jax.random.normal(ks[7], (DIM,), jnp.float32) * 0.1
    params = (Wx, bx, Ws, bs, Wa, ba, Wo, bo)

    x = jax.random.normal(ks[8], (B, N, DIM), jnp.float32)

    # n_tile=8 -> TN=16, 2 point-axis tiles with a padded tail: exercises the
    # online-softmax rescale and the row-validity mask at small scale.
    out, sw = erwin_transolver_forward(x, params, HEADS, DIM_HEAD, SLICE_NUM,
                                       n_tile=8, return_slice_weights=True)
    out = jax.block_until_ready(out)

    # optional-sw variant (no slice-weight HBM write) must also compile & match
    out_only = erwin_transolver_forward(x, params, HEADS, DIM_HEAD, SLICE_NUM,
                                        n_tile=8, return_slice_weights=False)
    out_only = jax.block_until_ready(out_only)

    ref = reference_forward(x, params, HEADS, DIM_HEAD, SLICE_NUM)
    err = float(jnp.max(jnp.abs(out - ref)))
    err_variant = float(jnp.max(jnp.abs(out_only - out)))
    assert out.shape == (B, N, DIM)
    assert sw.shape == (B, HEADS, N, SLICE_NUM)
    # bf16 MXU operands with f32 accumulation -> bf16-appropriate tolerance
    assert err < 2e-2, f"max abs err {err}"
    assert err_variant < 1e-5, f"variant mismatch {err_variant}"
    print("KERNEL_OK")
</pallas_src>

<mosaic_0001>
module attributes {stable_mosaic.version = 11 : i64} {
  func.func @_pass1_kernel(%arg0: i32, %arg1: i32, %arg2: memref<1x16x8xbf16, #tpu.memory_space<vmem>>, %arg3: memref<8x32xbf16, #tpu.memory_space<vmem>>, %arg4: memref<1x32xf32, #tpu.memory_space<vmem>>, %arg5: memref<32x130xbf16, #tpu.memory_space<vmem>>, %arg6: memref<1x130xf32, #tpu.memory_space<vmem>>, %arg7: memref<2x128xf32, #tpu.memory_space<vmem>>, %arg8: memref<32x128xf32, #tpu.memory_space<vmem>>, %arg9: memref<32x128xbf16, #tpu.memory_space<vmem>>, %arg10: memref<1x1x128xf32, #tpu.memory_space<vmem>>, %arg11: memref<1x1x128xf32, #tpu.memory_space<vmem>>, %arg12: memref<1x128x128xbf16, #tpu.memory_space<vmem>>, %arg13: memref<1x128xf32, #tpu.memory_space<vmem>>, %arg14: memref<1x128xf32, #tpu.memory_space<vmem>>, %arg15: memref<32x128xf32, #tpu.memory_space<vmem>>) attributes {dimension_semantics = [#tpu.dimension_semantics<parallel>, #tpu.dimension_semantics<arbitrary>], iteration_bounds = array<i64: 2, 2>, scalar_prefetch = 0 : i64, scratch_operands = 3 : i64, tpu.core_type = #tpu.core_type<tc>, window_params = [{transform_indices = @transform_0, window_bounds = array<i64: 1, 16, 8>}, {pipeline_mode = #tpu.pipeline_mode<synchronous>, transform_indices = @transform_1, window_bounds = array<i64: 8, 32>}, {pipeline_mode = #tpu.pipeline_mode<synchronous>, transform_indices = @transform_2, window_bounds = array<i64: 1, 32>}, {pipeline_mode = #tpu.pipeline_mode<synchronous>, transform_indices = @transform_3, window_bounds = array<i64: 32, 130>}, {pipeline_mode = #tpu.pipeline_mode<synchronous>, transform_indices = @transform_4, window_bounds = array<i64: 1, 130>}, {pipeline_mode = #tpu.pipeline_mode<synchronous>, transform_indices = @transform_5, window_bounds = array<i64: 2, 128>}, {pipeline_mode = #tpu.pipeline_mode<synchronous>, transform_indices = @transform_6, window_bounds = array<i64: 32, 128>}, {pipeline_mode = #tpu.pipeline_mode<synchronous>, transform_indices = @transform_7, window_bounds = array<i64: 32, 128>}, {transform_indices = @transform_8, window_bounds = array<i64: 1, 1, 128>}, {transform_indices = @transform_9, window_bounds = array<i64: 1, 1, 128>}, {transform_indices = @transform_10, window_bounds = array<i64: 1, 128, 128>}]} {
    %c0_i32 = arith.constant 0 : i32
    %0 = arith.cmpi eq, %arg1, %c0_i32 : i32
    %1 = arith.extui %0 : i1 to i32
    %c0_i32_0 = arith.constant 0 : i32
    %2 = arith.cmpi ne, %1, %c0_i32_0 : i32
    scf.if %2 {
      %cst_36 = arith.constant -1.000000e+30 : f32
      %64 = vector.broadcast %cst_36 : f32 to vector<1x128xf32>
      %c0_37 = arith.constant 0 : index
      %c0_38 = arith.constant 0 : index
      %65 = vector.load %arg13[%c0_37, %c0_38] : memref<1x128xf32, #tpu.memory_space<vmem>>, vector<1x128xf32>
      tpu.vector_store %arg13[%c0_37, %c0_38], %64 {strides = array<i32>} : memref<1x128xf32, #tpu.memory_space<vmem>>, vector<1x128xf32>,
      %cst_39 = arith.constant 0.000000e+00 : f32
      %66 = vector.broadcast %cst_39 : f32 to vector<1x128xf32>
      %c0_40 = arith.constant 0 : index
      %c0_41 = arith.constant 0 : index
      %67 = vector.load %arg14[%c0_40, %c0_41] : memref<1x128xf32, #tpu.memory_space<vmem>>, vector<1x128xf32>
      tpu.vector_store %arg14[%c0_40, %c0_41], %66 {strides = array<i32>} : memref<1x128xf32, #tpu.memory_space<vmem>>, vector<1x128xf32>,
      %cst_42 = arith.constant 0.000000e+00 : f32
      %68 = vector.broadcast %cst_42 : f32 to vector<32x128xf32>
      %c0_43 = arith.constant 0 : index
      %c0_44 = arith.constant 0 : index
      %69 = vector.load %arg15[%c0_43, %c0_44] : memref<32x128xf32, #tpu.memory_space<vmem>>, vector<32x128xf32>
      tpu.vector_store %arg15[%c0_43, %c0_44], %68 {strides = array<i32>} : memref<32x128xf32, #tpu.memory_space<vmem>>, vector<32x128xf32>,
    } else {
    }
    %c0 = arith.constant 0 : index
    %c0_1 = arith.constant 0 : index
    %c0_2 = arith.constant 0 : index
    %3 = vector.load %arg2[%c0, %c0_1, %c0_2] : memref<1x16x8xbf16, #tpu.memory_space<vmem>>, vector<1x16x8xbf16>
    %4 = vector.shape_cast %3 : vector<1x16x8xbf16> to vector<16x8xbf16>
    %c0_3 = arith.constant 0 : index
    %c0_4 = arith.constant 0 : index
    %5 = vector.load %arg3[%c0_3, %c0_4] : memref<8x32xbf16, #tpu.memory_space<vmem>>, vector<8x32xbf16>
    %cst = arith.constant dense<0.000000e+00> : vector<16x32xf32>
    %6 = tpu.matmul %4, %5, %cst {dimension_numbers = #tpu.dot_dimension_numbers<[1], [0], [0], [1], [0, 0, 1, 1], [], []>} : vector<16x8xbf16>, vector<8x32xbf16>, vector<16x32xf32> -> vector<16x32xf32>
    %c0_5 = arith.constant 0 : index
    %c0_6 = arith.constant 0 : index
    %7 = vector.load %arg4[%c0_5, %c0_6] : memref<1x32xf32, #tpu.memory_space<vmem>>, vector<1x32xf32>
    %8 = vector.broadcast %7 : vector<1x32xf32> to vector<16x32xf32>
    %9 = arith.addf %6, %8 : vector<16x32xf32>
    %10 = arith.truncf %9 : vector<16x32xf32> to vector<16x32xbf16>
    %c0_7 = arith.constant 0 : index
    %c0_8 = arith.constant 0 : index
    %11 = vector.load %arg5[%c0_7, %c0_8] : memref<32x130xbf16, #tpu.memory_space<vmem>>, vector<32x130xbf16>
    %cst_9 = arith.constant dense<0.000000e+00> : vector<16x130xf32>
    %12 = tpu.matmul %10, %11, %cst_9 {dimension_numbers = #tpu.dot_dimension_numbers<[1], [0], [0], [1], [0, 0, 1, 1], [], []>} : vector<16x32xbf16>, vector<32x130xbf16>, vector<16x130xf32> -> vector<16x130xf32>
    %c0_10 = arith.constant 0 : index
    %c0_11 = arith.constant 0 : index
    %13 = vector.load %arg6[%c0_10, %c0_11] : memref<1x130xf32, #tpu.memory_space<vmem>>, vector<1x130xf32>
    %14 = vector.broadcast %13 : vector<1x130xf32> to vector<16x130xf32>
    %15 = arith.addf %12, %14 : vector<16x130xf32>
    %16 = vector.extract_strided_slice %15 {offsets = [0, 0], sizes = [16, 128], strides = [1, 1]} : vector<16x130xf32> to vector<16x128xf32>
    %17 = vector.extract_strided_slice %15 {offsets = [0, 128], sizes = [16, 2], strides = [1, 1]} : vector<16x130xf32> to vector<16x2xf32>
    %cst_12 = arith.constant -4.000000e-01 : f32
    %cst_13 = arith.constant 4.000000e-01 : f32
    %18 = vector.broadcast %cst_12 : f32 to vector<16x2xf32>
    %19 = arith.maximumf %18, %17 : vector<16x2xf32>
    %20 = vector.broadcast %cst_13 : f32 to vector<16x2xf32>
    %21 = arith.minimumf %20, %19 : vector<16x2xf32>
    %cst_14 = arith.constant 5.000000e-01 : f32
    %22 = vector.broadcast %cst_14 : f32 to vector<16x2xf32>
    %23 = arith.addf %22, %21 : vector<16x2xf32>
    %24 = tpu.reciprocal %23 : vector<16x2xf32> -> vector<16x2xf32>
    %c0_15 = arith.constant 0 : index
    %c0_16 = arith.constant 0 : index
    %25 = vector.load %arg7[%c0_15, %c0_16] : memref<2x128xf32, #tpu.memory_space<vmem>>, vector<2x128xf32>
    %cst_17 = arith.constant dense<0.000000e+00> : vector<16x128xf32>
    %26 = tpu.matmul %24, %25, %cst_17 {dimension_numbers = #tpu.dot_dimension_numbers<[1], [0], [0], [1], [0, 0, 1, 1], [], []>} : vector<16x2xf32>, vector<2x128xf32>, vector<16x128xf32> -> vector<16x128xf32>
    %27 = arith.mulf %16, %26 : vector<16x128xf32>
    %28 = tpu.iota {dimensions = array<i32: 0>} : vector<16x128xi32>
    %c16_i32 = arith.constant 16 : i32
    %29 = arith.muli %arg1, %c16_i32 : i32
    %30 = vector.broadcast %29 : i32 to vector<16x128xi32>
    %31 = arith.addi %28, %30 : vector<16x128xi32>
    %c20_i32 = arith.constant 20 : i32
    %32 = vector.broadcast %c20_i32 : i32 to vector<16x128xi32>
    %33 = arith.cmpi slt, %31, %32 : vector<16x128xi32>
    %cst_18 = arith.constant -1.000000e+30 : f32
    %34 = vector.broadcast %cst_18 : f32 to vector<16x128xf32>
    %35 = arith.select %33, %27, %34 : vector<16x128xi1>, vector<16x128xf32>
    %c0_19 = arith.constant 0 : index
    %c0_20 = arith.constant 0 : index
    %36 = vector.load %arg13[%c0_19, %c0_20] : memref<1x128xf32, #tpu.memory_space<vmem>>, vector<1x128xf32>
    %cst_21 = arith.constant dense<0xFF800000> : vector<128xf32>
    %37 = vector.multi_reduction <maximumf>, %35, %cst_21 [0] : vector<16x128xf32> to vector<128xf32>
    %38 = vector.shape_cast %37 : vector<128xf32> to vector<1x128xf32>
    %39 = arith.maximumf %36, %38 : vector<1x128xf32>
    %40 = arith.subf %36, %39 : vector<1x128xf32>
    %41 = math.exp %40 : vector<1x128xf32>
    %42 = vector.broadcast %39 : vector<1x128xf32> to vector<16x128xf32>
    %43 = arith.subf %35, %42 : vector<16x128xf32>
    %44 = math.exp %43 : vector<16x128xf32>
    %cst_22 = arith.constant 0.000000e+00 : f32
    %45 = vector.broadcast %cst_22 : f32 to vector<16x128xf32>
    %46 = arith.select %33, %44, %45 : vector<16x128xi1>, vector<16x128xf32>
    %c0_23 = arith.constant 0 : index
    %c0_24 = arith.constant 0 : index
    %47 = vector.load %arg14[%c0_23, %c0_24] : memref<1x128xf32, #tpu.memory_space<vmem>>, vector<1x128xf32>
    %48 = arith.mulf %41, %47 : vector<1x128xf32>
    %cst_25 = arith.constant dense<0.000000e+00> : vector<128xf32>
    %49 = vector.multi_reduction <add>, %46, %cst_25 [0] : vector<16x128xf32> to vector<128xf32>
    %50 = vector.shape_cast %49 : vector<128xf32> to vector<1x128xf32>
    %51 = arith.addf %48, %50 : vector<1x128xf32>
    %c0_26 = arith.constant 0 : index
    %c0_27 = arith.constant 0 : index
    %52 = vector.load %arg14[%c0_26, %c0_27] : memref<1x128xf32, #tpu.memory_space<vmem>>, vector<1x128xf32>
    tpu.vector_store %arg14[%c0_26, %c0_27], %51 {strides = array<i32>} : memref<1x128xf32, #tpu.memory_space<vmem>>, vector<1x128xf32>,
    %c0_28 = arith.constant 0 : index
    %c0_29 = arith.constant 0 : index
    %53 = vector.load %arg15[%c0_28, %c0_29] : memref<32x128xf32, #tpu.memory_space<vmem>>, vector<32x128xf32>
    %54 = vector.broadcast %41 : vector<1x128xf32> to vector<32x128xf32>
    %55 = arith.mulf %54, %53 : vector<32x128xf32>
    %56 = arith.truncf %46 : vector<16x128xf32> to vector<16x128xbf16>
    %cst_30 = arith.constant dense<0.000000e+00> : vector<32x128xf32>
    %57 = tpu.matmul %10, %56, %cst_30 {dimension_numbers = #tpu.dot_dimension_numbers<[0], [0], [1], [1], [0, 1, 1, 1], [], []>} : vector<16x32xbf16>, vector<16x128xbf16>, vector<32x128xf32> -> vector<32x128xf32>
    %58 = arith.addf %55, %57 : vector<32x128xf32>
    %c0_31 = arith.constant 0 : index
    %c0_32 = arith.constant 0 : index
    %59 = vector.load %arg15[%c0_31, %c0_32] : memref<32x128xf32, #tpu.memory_space<vmem>>, vector<32x128xf32>
    tpu.vector_store %arg15[%c0_31, %c0_32], %58 {strides = array<i32>} : memref<32x128xf32, #tpu.memory_space<vmem>>, vector<32x128xf32>,
    %c0_33 = arith.constant 0 : index
    %c0_34 = arith.constant 0 : index
    %60 = vector.load %arg13[%c0_33, %c0_34] : memref<1x128xf32, #tpu.memory_space<vmem>>, vector<1x128xf32>
    tpu.vector_store %arg13[%c0_33, %c0_34], %39 {strides = array<i32>} : memref<1x128xf32, #tpu.memory_space<vmem>>, vector<1x128xf32>,
    %c1_i32 = arith.constant 1 : i32
    %61 = arith.cmpi eq, %arg1, %c1_i32 : i32
    %62 = arith.extui %61 : i1 to i32
    %c0_i32_35 = arith.constant 0 : i32
    %63 = arith.cmpi ne, %62, %c0_i32_35 : i32
    scf.if %63 {
      %c0_36 = arith.constant 0 : index
      %c0_37 = arith.constant 0 : index
      %64 = vector.load %arg14[%c0_36, %c0_37] : memref<1x128xf32, #tpu.memory_space<vmem>>, vector<1x128xf32>
      %cst_38 = arith.constant 1.000010e+00 : f32
      %65 = vector.broadcast %cst_38 : f32 to vector<1x128xf32>
      %66 = arith.mulf %64, %65 : vector<1x128xf32>
      %67 = tpu.reciprocal %66 : vector<1x128xf32> -> vector<1x128xf32>
      %c0_39 = arith.constant 0 : index
      %c0_40 = arith.constant 0 : index
      %68 = vector.load %arg15[%c0_39, %c0_40] : memref<32x128xf32, #tpu.memory_space<vmem>>, vector<32x128xf32>
      %69 = vector.broadcast %67 : vector<1x128xf32> to vector<32x128xf32>
      %70 = arith.mulf %68, %69 : vector<32x128xf32>
      %c0_41 = arith.constant 0 : index
      %c0_42 = arith.constant 0 : index
      %71 = vector.load %arg8[%c0_41, %c0_42] : memref<32x128xf32, #tpu.memory_space<vmem>>, vector<32x128xf32>
      %72 = arith.mulf %70, %71 : vector<32x128xf32>
      %73 = arith.truncf %72 : vector<32x128xf32> to vector<32x128xbf16>
      %c0_43 = arith.constant 0 : index
      %c0_44 = arith.constant 0 : index
      %74 = vector.load %arg9[%c0_43, %c0_44] : memref<32x128xbf16, #tpu.memory_space<vmem>>, vector<32x128xbf16>
      %cst_45 = arith.constant dense<0.000000e+00> : vector<128x128xf32>
      %75 = tpu.matmul %73, %74, %cst_45 {dimension_numbers = #tpu.dot_dimension_numbers<[0], [0], [1], [1], [0, 1, 1, 1], [], []>} : vector<32x128xbf16>, vector<32x128xbf16>, vector<128x128xf32> -> vector<128x128xf32>
      %76 = arith.truncf %75 : vector<128x128xf32> to vector<128x128xbf16>
      %c0_46 = arith.constant 0 : index
      %c0_47 = arith.constant 0 : index
      %c0_48 = arith.constant 0 : index
      %77 = vector.load %arg12[%c0_46, %c0_47, %c0_48] : memref<1x128x128xbf16, #tpu.memory_space<vmem>>, vector<1x128x128xbf16>
      %78 = vector.shape_cast %77 : vector<1x128x128xbf16> to vector<128x128xbf16>
      %79 = vector.shape_cast %76 : vector<128x128xbf16> to vector<1x128x128xbf16>
      tpu.vector_store %arg12[%c0_46, %c0_47, %c0_48], %79 {strides = array<i32>} : memref<1x128x128xbf16, #tpu.memory_space<vmem>>, vector<1x128x128xbf16>,
      %c0_49 = arith.constant 0 : index
      %c0_50 = arith.constant 0 : index
      %80 = vector.load %arg13[%c0_49, %c0_50] : memref<1x128xf32, #tpu.memory_space<vmem>>, vector<1x128xf32>
      %c0_51 = arith.constant 0 : index
      %c0_52 = arith.constant 0 : index
      %c0_53 = arith.constant 0 : index
      %81 = vector.load %arg10[%c0_51, %c0_52, %c0_53] : memref<1x1x128xf32, #tpu.memory_space<vmem>>, vector<1x1x128xf32>
      %82 = vector.shape_cast %81 : vector<1x1x128xf32> to vector<1x128xf32>
      %83 = vector.shape_cast %80 : vector<1x128xf32> to vector<1x1x128xf32>
      tpu.vector_store %arg10[%c0_51, %c0_52, %c0_53], %83 {strides = array<i32>} : memref<1x1x128xf32, #tpu.memory_space<vmem>>, vector<1x1x128xf32>,
      %c0_54 = arith.constant 0 : index
      %c0_55 = arith.constant 0 : index
      %84 = vector.load %arg14[%c0_54, %c0_55] : memref<1x128xf32, #tpu.memory_space<vmem>>, vector<1x128xf32>
      %c0_56 = arith.constant 0 : index
      %c0_57 = arith.constant 0 : index
      %c0_58 = arith.constant 0 : index
      %85 = vector.load %arg11[%c0_56, %c0_57, %c0_58] : memref<1x1x128xf32, #tpu.memory_space<vmem>>, vector<1x1x128xf32>
      %86 = vector.shape_cast %85 : vector<1x1x128xf32> to vector<1x128xf32>
      %87 = vector.shape_cast %84 : vector<1x128xf32> to vector<1x1x128xf32>
      tpu.vector_store %arg11[%c0_56, %c0_57, %c0_58], %87 {strides = array<i32>} : memref<1x1x128xf32, #tpu.memory_space<vmem>>, vector<1x1x128xf32>,
    } else {
    }
    return
  }
  func.func @transform_0(%arg0: i32, %arg1: i32) -> (i32, i32, i32) {
    %c0_i32 = arith.constant 0 : i32
    %c0_i32_0 = arith.constant 0 : i32
    return %arg0, %arg1, %c0_i32 : i32, i32, i32
  }
  func.func @transform_1(%arg0: i32, %arg1: i32) -> (i32, i32) {
    %c0_i32 = arith.constant 0 : i32
    %c0_i32_0 = arith.constant 0 : i32
    %c0_i32_1 = arith.constant 0 : i32
    return %c0_i32, %c0_i32_0 : i32, i32
  }
  func.func @transform_2(%arg0: i32, %arg1: i32) -> (i32, i32) {
    %c0_i32 = arith.constant 0 : i32
    %c0_i32_0 = arith.constant 0 : i32
    %c0_i32_1 = arith.constant 0 : i32
    return %c0_i32, %c0_i32_0 : i32, i32
  }
  func.func @transform_3(%arg0: i32, %arg1: i32) -> (i32, i32) {
    %c0_i32 = arith.constant 0 : i32
    %c0_i32_0 = arith.constant 0 : i32
    %c0_i32_1 = arith.constant 0 : i32
    return %c0_i32, %c0_i32_0 : i32, i32
  }
  func.func @transform_4(%arg0: i32, %arg1: i32) -> (i32, i32) {
    %c0_i32 = arith.constant 0 : i32
    %c0_i32_0 = arith.constant 0 : i32
    %c0_i32_1 = arith.constant 0 : i32
    return %c0_i32, %c0_i32_0 : i32, i32
  }
  func.func @transform_5(%arg0: i32, %arg1: i32) -> (i32, i32) {
    %c0_i32 = arith.constant 0 : i32
    %c0_i32_0 = arith.constant 0 : i32
    %c0_i32_1 = arith.constant 0 : i32
    return %c0_i32, %c0_i32_0 : i32, i32
  }
  func.func @transform_6(%arg0: i32, %arg1: i32) -> (i32, i32) {
    %c0_i32 = arith.constant 0 : i32
    %c0_i32_0 = arith.constant 0 : i32
    %c0_i32_1 = arith.constant 0 : i32
    return %c0_i32, %c0_i32_0 : i32, i32
  }
  func.func @transform_7(%arg0: i32, %arg1: i32) -> (i32, i32) {
    %c0_i32 = arith.constant 0 : i32
    %c0_i32_0 = arith.constant 0 : i32
    %c0_i32_1 = arith.constant 0 : i32
    return %c0_i32, %c0_i32_0 : i32, i32
  }
  func.func @transform_8(%arg0: i32, %arg1: i32) -> (i32, i32, i32) {
    %c0_i32 = arith.constant 0 : i32
    %c0_i32_0 = arith.constant 0 : i32
    %c0_i32_1 = arith.constant 0 : i32
    return %arg0, %c0_i32, %c0_i32_0 : i32, i32, i32
  }
  func.func @transform_9(%arg0: i32, %arg1: i32) -> (i32, i32, i32) {
    %c0_i32 = arith.constant 0 : i32
    %c0_i32_0 = arith.constant 0 : i32
    %c0_i32_1 = arith.constant 0 : i32
    return %arg0, %c0_i32, %c0_i32_0 : i32, i32, i32
  }
  func.func @transform_10(%arg0: i32, %arg1: i32) -> (i32, i32, i32) {
    %c0_i32 = arith.constant 0 : i32
    %c0_i32_0 = arith.constant 0 : i32
    %c0_i32_1 = arith.constant 0 : i32
    return %arg0, %c0_i32, %c0_i32_0 : i32, i32, i32
  }
}

</mosaic_0001>

<llo_original>
// kernel: tpu_custom_call.1
$region0: #{tpu_custom_call.1}
  #allocation0 [shape = 'u32[]', space=smem, size = 0x4, offset = 0x4, fixed_abs, tag = 'smem constant byte address 0x4 - core index']
  #allocation1 [shape = 'u32[144,128]{1,0:T(1,128)}', space=vmem, size = 0x12000, scoped, tag = 'internal scratch']
  #allocation2 [shape = 'f32[1,128]{1,0:T(1,128)}', space=vmem, size = 0x200, scoped, tag = 'scratch operand']
  #allocation3 [shape = 'f32[1,128]{1,0:T(1,128)}', space=vmem, size = 0x200, scoped, tag = 'scratch operand']
  #allocation4 [shape = 'f32[32,128]{1,0:T(8,128)}', space=vmem, size = 0x4000, scoped, tag = 'scratch operand']
  %s0 = inlined_call_operand.vmem [shape: bf16[2,32,8], index: 0, kind: input, shape index: {}]
  %s1 = inlined_call_operand.hbm [shape: bf16[8,32], index: 1, kind: input, shape index: {}]
  %s2 = inlined_call_operand.vmem [shape: f32[1,32], index: 2, kind: input, shape index: {}]
  %s3 = inlined_call_operand.vmem [shape: bf16[32,130], index: 3, kind: input, shape index: {}]
  %s4 = inlined_call_operand.vmem [shape: f32[1,130], index: 4, kind: input, shape index: {}]
  %s5 = inlined_call_operand.vmem [shape: f32[2,128], index: 5, kind: input, shape index: {}]
  %s6 = inlined_call_operand.hbm [shape: f32[32,128], index: 6, kind: input, shape index: {}]
  %s7 = inlined_call_operand.vmem [shape: bf16[32,128], index: 7, kind: input, shape index: {}]
  %s8 = inlined_call_operand.hbm [shape: f32[2,1,128], index: 8, kind: output, shape index: {0}]
  %s9 = inlined_call_operand.hbm [shape: f32[2,1,128], index: 9, kind: output, shape index: {1}]
  %s10 = inlined_call_operand.hbm [shape: bf16[2,128,128], index: 10, kind: output, shape index: {2}]
  %11 = xla_tuple %s8, %s9, %s10
  %s12 = sld [smem:[#allocation0]]
  $region97: #{tpu_custom_call.1} parent=0
    _
  %s14 = ssub.s32 1, %s12
  %s15 = scalar_select 0, %s14, %s12
  $region1: #{tpu_custom_call.1} parent=0
    #allocation5 [shape = 'u8[2048]{0}', space=vmem, size = 0x800, scoped, tag = 'input window, operand 1, single buffered']
    #allocation6 [shape = 's32[2]{0}', space=sflag, size = 0x8, scoped, tag = 'scoped memory for tpu_custom_call.1']
    #allocation7 [shape = 's32[2]{0}', space=sflag, size = 0x8, scoped, tag = 'scoped memory for tpu_custom_call.1']
    #allocation8 [shape = 'u8[16384]{0}', space=vmem, size = 0x4000, scoped, tag = 'input window, operand 6, single buffered']
    #allocation9 [shape = 's32[1]{0}', space=sflag, size = 0x4, scoped, tag = 'scoped memory for tpu_custom_call.1']
    #allocation10 [shape = 'u8[1024]{0}', space=vmem, size = 0x400, scoped, tag = 'output window, operand 0']
    #allocation11 [shape = 'u8[1024]{0}', space=vmem, size = 0x400, scoped, tag = 'output window, operand 1']
    #allocation12 [shape = 's32[2]{0}', space=sflag, size = 0x8, scoped, tag = 'scoped memory for tpu_custom_call.1']
    #allocation13 [shape = 'u8[65536]{0}', space=vmem, size = 0x10000, scoped, tag = 'output window, operand 2']
    %16 = vsyncpa [#allocation6], 0
    %17 = vsyncpa [#allocation9], 0
    %18 = vsyncpa [#allocation7], 0
    %s19 = scalar_lea.sflag [#allocation7], 1
    %20 = vsyncpa %s19, 0
    %21 = vsyncpa [#allocation12], 0
    %s22 = scalar_lea.sflag [#allocation12], 1
    %23 = vsyncpa %s22, 0
    loop: start=0, step=1, limit=6
    $region2: #{tpu_custom_call.1} parent=1 // loop_pre_header
      _
    $region3: #{tpu_custom_call.1} parent=1 // loop_header
      %s25 = sphi 0, %s29
      %p26 = scmp.ge.s32.totalorder %s25, 6
      %s32 = sphi 0, %s44
      %s33 = sphi 0, %s40
      %s34 = sphi 0, %s32
      %s35 = sphi 0, %s33
      %s36 = sphi 0, %s34
      %s37 = sphi 0, %s35
      %s49 = sphi 0, %s51
      %s52 = sphi 0, %s49
      %s53 = sphi 0, %s52
      %s69 = sphi 0, %s53
      %s73 = sphi 0, %s73
      %s75 = sphi 0, %s73
      %s76 = sphi 0, %s75
      %s90 = sphi 0, %s76
      %s94 = sphi 0, %s94
      %s96 = sphi 0, %s94
      %s97 = sphi 0, %s96
      %s111 = sphi 0, %s97
      %s115 = sphi 0, %s115
      %s117 = sphi 0, %s115
      %s118 = sphi 0, %s117
      %s132 = sphi 0, %s118
      %s136 = sphi 0, %s136
      %s138 = sphi 0, %s136
      %s139 = sphi 0, %s138
      %s153 = sphi 0, %s139
      %s157 = sphi 0, %s157
      %s159 = sphi 0, %s157
      %s160 = sphi 0, %s159
      %s174 = sphi 0, %s160
      %s178 = sphi 0, %s178
      %s180 = sphi 0, %s178
      %s181 = sphi 0, %s180
      %s195 = sphi 0, %s181
      %s199 = sphi 0, %s199
      %s201 = sphi 0, %s199
      %s202 = sphi 0, %s201
      %s216 = sphi 0, %s202
      %s222 = sphi 0, %s224
      %s225 = sphi 0, %s222
      %s226 = sphi 0, %s225
      %s242 = sphi 0, %s226
      %s248 = sphi 0, %s250
      %s251 = sphi 0, %s248
      %s252 = sphi 0, %s251
      %s268 = sphi 0, %s252
      %s274 = sphi 0, %s276
      %s277 = sphi 0, %s274
      %s278 = sphi 0, %s277
      %s294 = sphi 0, %s278
    $region4: #{tpu_custom_call.1} parent=1 // loop_header_branch
      %28 = sbr.rel (%p26) target = $region8
    $region5: #{tpu_custom_call.1} parent=1 // loop_body
      %s30 = ssub.s32 %s25, 1
      %s31 = ssub.s32 %s25, 2
      %s38 = sadd.s32 1, %s33
      %p39 = scmp.ge.s32.totalorder %s38, 2
      %s40 = scalar_select %p39, 0, %s38
      %s41 = sadd.s32 1, %s32
      %s42 = scalar_select %p39, %s41, %s32
      %p43 = scmp.ge.s32.totalorder %s42, 2
      %s44 = scalar_select %p43, 0, %s42
      %s45 = ssub.s32 %s32, %s44
      %s46 = ssub.s32 %s33, %s40
      %s47 = sor.u32 %s45, %s46
      %p48 = scmp.eq.s32.totalorder %s47, 0
      %s50 = sadd.s32 %s49, 1
      %s51 = scalar_select %p48, %s49, %s50
      %p54 = pneg %p48
      %p55 = scmp.eq.s32.totalorder %s25, 3
      %p56 = por %p54, %p55
      %p57 = scmp.ne.s32.totalorder %s49, %s52
      %p58 = scmp.eq.s32.totalorder %s25, 0
      %p59 = por %p57, %p58
      %p60 = scmp.ne.s32.totalorder %s49, %s52
      %p61 = scmp.eq.s32.totalorder %s30, 3
      %p62 = por %p60, %p61
      %p63 = scmp.ne.s32.totalorder %s52, %s53
      %p64 = scmp.eq.s32.totalorder %s30, 0
      %p65 = por %p63, %p64
      %p66 = scmp.ne.s32.totalorder %s52, %s53
      %p67 = scmp.eq.s32.totalorder %s31, 3
      %p68 = por %p66, %p67
      %p70 = scmp.ne.s32.totalorder %s53, %s69
      %p71 = scmp.eq.s32.totalorder %s31, 0
      %p72 = por %p70, %p71
      %s74 = sadd.s32 %s73, 1
      %p77 = scmp.eq.s32.totalorder %s25, 3
      %p78 = scmp.ne.s32.totalorder %s73, %s75
      %p79 = scmp.eq.s32.totalorder %s25, 0
      %p80 = por %p78, %p79
      %p81 = scmp.ne.s32.totalorder %s73, %s75
      %p82 = scmp.eq.s32.totalorder %s30, 3
      %p83 = por %p81, %p82
      %p84 = scmp.ne.s32.totalorder %s75, %s76
      %p85 = scmp.eq.s32.totalorder %s30, 0
      %p86 = por %p84, %p85
      %p87 = scmp.ne.s32.totalorder %s75, %s76
      %p88 = scmp.eq.s32.totalorder %s31, 3
      %p89 = por %p87, %p88
      %p91 = scmp.ne.s32.totalorder %s76, %s90
      %p92 = scmp.eq.s32.totalorder %s31, 0
      %p93 = por %p91, %p92
      %s95 = sadd.s32 %s94, 1
      %p98 = scmp.eq.s32.totalorder %s25, 3
      %p99 = scmp.ne.s32.totalorder %s94, %s96
      %p100 = scmp.eq.s32.totalorder %s25, 0
      %p101 = por %p99, %p100
      %p102 = scmp.ne.s32.totalorder %s94, %s96
      %p103 = scmp.eq.s32.totalorder %s30, 3
      %p104 = por %p102, %p103
      %p105 = scmp.ne.s32.totalorder %s96, %s97
      %p106 = scmp.eq.s32.totalorder %s30, 0
      %p107 = por %p105, %p106
      %p108 = scmp.ne.s32.totalorder %s96, %s97
      %p109 = scmp.eq.s32.totalorder %s31, 3
      %p110 = por %p108, %p109
      %p112 = scmp.ne.s32.totalorder %s97, %s111
      %p113 = scmp.eq.s32.totalorder %s31, 0
      %p114 = por %p112, %p113
      %s116 = sadd.s32 %s115, 1
      %p119 = scmp.eq.s32.totalorder %s25, 3
      %p120 = scmp.ne.s32.totalorder %s115, %s117
      %p121 = scmp.eq.s32.totalorder %s25, 0
      %p122 = por %p120, %p121
      %p123 = scmp.ne.s32.totalorder %s115, %s117
      %p124 = scmp.eq.s32.totalorder %s30, 3
      %p125 = por %p123, %p124
      %p126 = scmp.ne.s32.totalorder %s117, %s118
      %p127 = scmp.eq.s32.totalorder %s30, 0
      %p128 = por %p126, %p127
      %p129 = scmp.ne.s32.totalorder %s117, %s118
      %p130 = scmp.eq.s32.totalorder %s31, 3
      %p131 = por %p129, %p130
      %p133 = scmp.ne.s32.totalorder %s118, %s132
      %p134 = scmp.eq.s32.totalorder %s31, 0
      %p135 = por %p133, %p134
      %s137 = sadd.s32 %s136, 1
      %p140 = scmp.eq.s32.totalorder %s25, 3
      %p141 = scmp.ne.s32.totalorder %s136, %s138
      %p142 = scmp.eq.s32.totalorder %s25, 0
      %p143 = por %p141, %p142
      %p144 = scmp.ne.s32.totalorder %s136, %s138
      %p145 = scmp.eq.s32.totalorder %s30, 3
      %p146 = por %p144, %p145
      %p147 = scmp.ne.s32.totalorder %s138, %s139
      %p148 = scmp.eq.s32.totalorder %s30, 0
      %p149 = por %p147, %p148
      %p150 = scmp.ne.s32.totalorder %s138, %s139
      %p151 = scmp.eq.s32.totalorder %s31, 3
      %p152 = por %p150, %p151
      %p154 = scmp.ne.s32.totalorder %s139, %s153
      %p155 = scmp.eq.s32.totalorder %s31, 0
      %p156 = por %p154, %p155
      %s158 = sadd.s32 %s157, 1
      %p161 = scmp.eq.s32.totalorder %s25, 3
      %p162 = scmp.ne.s32.totalorder %s157, %s159
      %p163 = scmp.eq.s32.totalorder %s25, 0
      %p164 = por %p162, %p163
      %p165 = scmp.ne.s32.totalorder %s157, %s159
      %p166 = scmp.eq.s32.totalorder %s30, 3
      %p167 = por %p165, %p166
      %p168 = scmp.ne.s32.totalorder %s159, %s160
      %p169 = scmp.eq.s32.totalorder %s30, 0
      %p170 = por %p168, %p169
      %p171 = scmp.ne.s32.totalorder %s159, %s160
      %p172 = scmp.eq.s32.totalorder %s31, 3
      %p173 = por %p171, %p172
      %p175 = scmp.ne.s32.totalorder %s160, %s174
      %p176 = scmp.eq.s32.totalorder %s31, 0
      %p177 = por %p175, %p176
      %s179 = sadd.s32 %s178, 1
      %p182 = scmp.eq.s32.totalorder %s25, 3
      %p183 = scmp.ne.s32.totalorder %s178, %s180
      %p184 = scmp.eq.s32.totalorder %s25, 0
      %p185 = por %p183, %p184
      %p186 = scmp.ne.s32.totalorder %s178, %s180
      %p187 = scmp.eq.s32.totalorder %s30, 3
      %p188 = por %p186, %p187
      %p189 = scmp.ne.s32.totalorder %s180, %s181
      %p190 = scmp.eq.s32.totalorder %s30, 0
      %p191 = por %p189, %p190
      %p192 = scmp.ne.s32.totalorder %s180, %s181
      %p193 = scmp.eq.s32.totalorder %s31, 3
      %p194 = por %p192, %p193
      %p196 = scmp.ne.s32.totalorder %s181, %s195
      %p197 = scmp.eq.s32.totalorder %s31, 0
      %p198 = por %p196, %p197
      %s200 = sadd.s32 %s199, 1
      %p203 = scmp.eq.s32.totalorder %s25, 3
      %p204 = scmp.ne.s32.totalorder %s199, %s201
      %p205 = scmp.eq.s32.totalorder %s25, 0
      %p206 = por %p204, %p205
      %p207 = scmp.ne.s32.totalorder %s199, %s201
      %p208 = scmp.eq.s32.totalorder %s30, 3
      %p209 = por %p207, %p208
      %p210 = scmp.ne.s32.totalorder %s201, %s202
      %p211 = scmp.eq.s32.totalorder %s30, 0
      %p212 = por %p210, %p211
      %p213 = scmp.ne.s32.totalorder %s201, %s202
      %p214 = scmp.eq.s32.totalorder %s31, 3
      %p215 = por %p213, %p214
      %p217 = scmp.ne.s32.totalorder %s202, %s216
      %p218 = scmp.eq.s32.totalorder %s31, 0
      %p219 = por %p217, %p218
      %s220 = ssub.s32 %s32, %s44
      %p221 = scmp.eq.s32.totalorder %s220, 0
      %s223 = sadd.s32 %s222, 1
      %s224 = scalar_select %p221, %s222, %s223
      %p227 = pneg %p221
      %p228 = scmp.eq.s32.totalorder %s25, 3
      %p229 = por %p227, %p228
      %p230 = scmp.ne.s32.totalorder %s222, %s225
      %p231 = scmp.eq.s32.totalorder %s25, 0
      %p232 = por %p230, %p231
      %p233 = scmp.ne.s32.totalorder %s222, %s225
      %p234 = scmp.eq.s32.totalorder %s30, 3
      %p235 = por %p233, %p234
      %p236 = scmp.ne.s32.totalorder %s225, %s226
      %p237 = scmp.eq.s32.totalorder %s30, 0
      %p238 = por %p236, %p237
      %p239 = scmp.ne.s32.totalorder %s225, %s226
      %p240 = scmp.eq.s32.totalorder %s31, 3
      %p241 = por %p239, %p240
      %p243 = scmp.ne.s32.totalorder %s226, %s242
      %p244 = scmp.eq.s32.totalorder %s31, 0
      %p245 = por %p243, %p244
      %s246 = ssub.s32 %s32, %s44
      %p247 = scmp.eq.s32.totalorder %s246, 0
      %s249 = sadd.s32 %s248, 1
      %s250 = scalar_select %p247, %s248, %s249
      %p253 = pneg %p247
      %p254 = scmp.eq.s32.totalorder %s25, 3
      %p255 = por %p253, %p254
      %p256 = scmp.ne.s32.totalorder %s248, %s251
      %p257 = scmp.eq.s32.totalorder %s25, 0
      %p258 = por %p256, %p257
      %p259 = scmp.ne.s32.totalorder %s248, %s251
      %p260 = scmp.eq.s32.totalorder %s30, 3
      %p261 = por %p259, %p260
      %p262 = scmp.ne.s32.totalorder %s251, %s252
      %p263 = scmp.eq.s32.totalorder %s30, 0
      %p264 = por %p262, %p263
      %p265 = scmp.ne.s32.totalorder %s251, %s252
      %p266 = scmp.eq.s32.totalorder %s31, 3
      %p267 = por %p265, %p266
      %p269 = scmp.ne.s32.totalorder %s252, %s268
      %p270 = scmp.eq.s32.totalorder %s31, 0
      %p271 = por %p269, %p270
      %s272 = ssub.s32 %s32, %s44
      %p273 = scmp.eq.s32.totalorder %s272, 0
      %s275 = sadd.s32 %s274, 1
      %s276 = scalar_select %p273, %s274, %s275
      %p279 = pneg %p273
      %p280 = scmp.eq.s32.totalorder %s25, 3
      %p281 = por %p279, %p280
      %p282 = scmp.ne.s32.totalorder %s274, %s277
      %p283 = scmp.eq.s32.totalorder %s25, 0
      %p284 = por %p282, %p283
      %p285 = scmp.ne.s32.totalorder %s274, %s277
      %p286 = scmp.eq.s32.totalorder %s30, 3
      %p287 = por %p285, %p286
      %p288 = scmp.ne.s32.totalorder %s277, %s278
      %p289 = scmp.eq.s32.totalorder %s30, 0
      %p290 = por %p288, %p289
      %p291 = scmp.ne.s32.totalorder %s277, %s278
      %p292 = scmp.eq.s32.totalorder %s31, 3
      %p293 = por %p291, %p292
      %p295 = scmp.ne.s32.totalorder %s278, %s294
      %p296 = scmp.eq.s32.totalorder %s31, 0
      %p297 = por %p295, %p296
      %p298 = scmp.le.s32.totalorder 1, %s25
      %p299 = scmp.lt.s32.totalorder %s25, 5
      %p300 = pnand %p298, %p299
      %p301 = pneg %p300
      // Predicated region
      $region9: #{tpu_custom_call.1} parent=5 // pred_check
        _
      $region10: #{tpu_custom_call.1} parent=5 // pred_check_branch
        %303 = sbr.rel (%p300) target = $region12
      $region11: #{tpu_custom_call.1} parent=5 // pred_region
        %s304 = ssub.s32 %s25, 1
        // Predicated region
        $region13: #{tpu_custom_call.1} parent=11 // pred_check
          %p305 = pneg %p86
        $region14: #{tpu_custom_call.1} parent=11 // pred_check_branch
          %307 = sbr.rel (%p305) target = $region16
        $region15: #{tpu_custom_call.1} parent=11 // pred_region
          %s309 = ssub.s32 64, 64
          %310 = vsyncadd [#allocation6], %s309
          %s312 = sshll.u32 [#allocation5], 4
          %s313 = int_to_ptr.vmem [resolvable:$true] %s312
          %315 = dma.hbm_to_vmem [thread:$0]  %s1, 64, %s313, [#allocation6]
        $region16: #{tpu_custom_call.1} parent=11 // pred_fallthru
          _
        // Predicated region
        $region17: #{tpu_custom_call.1} parent=11 // pred_check
          %p316 = pneg %p107
        $region18: #{tpu_custom_call.1} parent=11 // pred_check_branch
          %318 = sbr.rel (%p316) target = $region20
        $region19: #{tpu_custom_call.1} parent=11 // pred_region
          _
        $region20: #{tpu_custom_call.1} parent=11 // pred_fallthru
          _
        // Predicated region
        $region21: #{tpu_custom_call.1} parent=11 // pred_check
          %p319 = pneg %p128
        $region22: #{tpu_custom_call.1} parent=11 // pred_check_branch
          %321 = sbr.rel (%p319) target = $region24
        $region23: #{tpu_custom_call.1} parent=11 // pred_region
          _
        $region24: #{tpu_custom_call.1} parent=11 // pred_fallthru
          _
        // Predicated region
        $region25: #{tpu_custom_call.1} parent=11 // pred_check
          %p322 = pneg %p149
        $region26: #{tpu_custom_call.1} parent=11 // pred_check_branch
          %324 = sbr.rel (%p322) target = $region28
        $region27: #{tpu_custom_call.1} parent=11 // pred_region
          _
        $region28: #{tpu_custom_call.1} parent=11 // pred_fallthru
          _
        // Predicated region
        $region29: #{tpu_custom_call.1} parent=11 // pred_check
          %p325 = pneg %p170
        $region30: #{tpu_custom_call.1} parent=11 // pred_check_branch
          %327 = sbr.rel (%p325) target = $region32
        $region31: #{tpu_custom_call.1} parent=11 // pred_region
          _
        $region32: #{tpu_custom_call.1} parent=11 // pred_fallthru
          _
        // Predicated region
        $region33: #{tpu_custom_call.1} parent=11 // pred_check
          %p328 = pneg %p191
        $region34: #{tpu_custom_call.1} parent=11 // pred_check_branch
          %330 = sbr.rel (%p328) target = $region36
        $region35: #{tpu_custom_call.1} parent=11 // pred_region
          %s332 = ssub.s32 512, 512
          %333 = vsyncadd [#allocation9], %s332
          %s334 = sshll.u32 [#allocation8], 4
          %s335 = int_to_ptr.vmem [resolvable:$true] %s334
          %340 = dma.hbm_to_vmem [thread:$0]  %s6, 512, %s335, [#allocation9], 128, 128, 8
        $region36: #{tpu_custom_call.1} parent=11 // pred_fallthru
          _
        // Predicated region
        $region37: #{tpu_custom_call.1} parent=11 // pred_check
          %p341 = pneg %p212
        $region38: #{tpu_custom_call.1} parent=11 // pred_check_branch
          %343 = sbr.rel (%p341) target = $region40
        $region39: #{tpu_custom_call.1} parent=11 // pred_region
          _
        $region40: #{tpu_custom_call.1} parent=11 // pred_fallthru
          _
      $region12: #{tpu_custom_call.1} parent=5 // pred_fallthru
        _
      %p344 = scmp.lt.s32.totalorder %s25, 4
      // Predicated region
      $region41: #{tpu_custom_call.1} parent=5 // pred_check
        %p345 = pneg %p344
      $region42: #{tpu_custom_call.1} parent=5 // pred_check_branch
        %347 = sbr.rel (%p345) target = $region44
      $region43: #{tpu_custom_call.1} parent=5 // pred_region
        // Predicated region
        $region45: #{tpu_custom_call.1} parent=43 // pred_check
          %p348 = pneg %p59
        $region46: #{tpu_custom_call.1} parent=43 // pred_check_branch
          %350 = sbr.rel (%p348) target = $region48
        $region47: #{tpu_custom_call.1} parent=43 // pred_region
          %s351 = smul.u32 2, %s33
          %p352 = scmp.lt.s32.totalorder %s32, 1
          %s353 = scalar_select %p352, %s32, 1
          %p354 = scmp.lt.s32.totalorder %s351, 3
          %s355 = scalar_select %p354, %s351, 3
          %s356 = smul.addr %s353, 4
          %s357 = sadd.s32 %s355, %s356
          %s358 = smul.addr %s357, 4
          %s359 = scalar_lea.vmem %s0, %s358
          %s360 = smul.u32 2, %s33
        $region48: #{tpu_custom_call.1} parent=43 // pred_fallthru
          _
      $region44: #{tpu_custom_call.1} parent=5 // pred_fallthru
        _
      %p361 = scmp.le.s32.totalorder 1, %s25
      %p362 = scmp.lt.s32.totalorder %s25, 5
      %p363 = pnand %p361, %p362
      %p364 = pneg %p363
      // Predicated region
      $region49: #{tpu_custom_call.1} parent=5 // pred_check
        _
      $region50: #{tpu_custom_call.1} parent=5 // pred_check_branch
        %366 = sbr.rel (%p363) target = $region52
      $region51: #{tpu_custom_call.1} parent=5 // pred_region
        %s367 = ssub.s32 %s25, 1
        // Predicated region
        $region53: #{tpu_custom_call.1} parent=51 // pred_check
          %p368 = pneg %p86
        $region54: #{tpu_custom_call.1} parent=51 // pred_check_branch
          %370 = sbr.rel (%p368) target = $region56
        $region55: #{tpu_custom_call.1} parent=51 // pred_region
          %371 = dma.done [#allocation6], 64
        $region56: #{tpu_custom_call.1} parent=51 // pred_fallthru
          _
        // Predicated region
        $region57: #{tpu_custom_call.1} parent=51 // pred_check
          %p372 = pneg %p191
        $region58: #{tpu_custom_call.1} parent=51 // pred_check_branch
          %374 = sbr.rel (%p372) target = $region60
        $region59: #{tpu_custom_call.1} parent=51 // pred_region
          %375 = dma.done [#allocation9], 512
        $region60: #{tpu_custom_call.1} parent=51 // pred_fallthru
          _
        %s376 = smul.u32 2, %s35
        %p377 = scmp.lt.s32.totalorder %s34, 1
        %s378 = scalar_select %p377, %s34, 1
        %p379 = scmp.lt.s32.totalorder %s376, 3
        %s380 = scalar_select %p379, %s376, 3
        %s381 = smul.addr %s378, 4
        %s382 = sadd.s32 %s380, %s381
        %s383 = smul.addr %s382, 4
        %s384 = scalar_lea.vmem %s0, %s383
        %p385 = pneg %p65
        %p386 = pneg %p62
        %p387 = pneg %p86
        %p388 = pneg %p83
        %p389 = pneg %p107
        %p390 = pneg %p104
        %p391 = pneg %p128
        %p392 = pneg %p125
        %p393 = pneg %p149
        %p394 = pneg %p146
        %p395 = pneg %p170
        %p396 = pneg %p167
        %p397 = pneg %p191
        %p398 = pneg %p188
        %p399 = pneg %p212
        %p400 = pneg %p209
        %p401 = pneg %p238
        %p402 = pneg %p235
        %s403 = sand.u32 %s225, 1
        %s404 = scalar_lea.sflag [#allocation7], %s403
        %s405 = sand.u32 %s225, 1
        %s406 = scalar_lea.vmem [#allocation10], %s405
        %p407 = pneg %p264
        %p408 = pneg %p261
        %s409 = sand.u32 %s30, 1
        %s410 = scalar_lea.sflag [#allocation12], %s409
        %s411 = sand.u32 %s251, 1
        %s412 = scalar_lea.vmem [#allocation11], %s411
        %p413 = pneg %p290
        %p414 = pneg %p287
        %s415 = sand.u32 %s30, 1
        %s416 = scalar_lea.sflag [#allocation12], %s415
        %s417 = sand.u32 %s277, 1
        %s418 = smul.addr %s417, 64
        %s419 = scalar_lea.vmem [#allocation13], %s418
        %s420 = smul.u32 2, %s35
        %p421 = scmp.lt.s32.totalorder %s34, 1
        %s422 = scalar_select %p421, %s34, 1
        %p423 = scmp.lt.s32.totalorder %s420, 3
        %s424 = scalar_select %p423, %s420, 3
        %s425 = smul.addr %s422, 4
        %s426 = sadd.s32 %s424, %s425
        %s427 = smul.addr %s426, 4
        %s428 = scalar_lea.vmem %s0, %s427
        %s429 = smul.u32 2, %s35
        %p431 = scmp.eq.s32.totalorder %s35, 0
        // Predicated region
        $region61: #{tpu_custom_call.1} parent=51 // pred_check
          %p432 = pneg %p431
        $region62: #{tpu_custom_call.1} parent=51 // pred_check_branch
          %434 = sbr.rel (%p432) target = $region64
        $region63: #{tpu_custom_call.1} parent=51 // pred_region
          %435 = vst [vmem:[#allocation2] sm:$0x1] -1e+30
          %436 = vst [vmem:[#allocation3] sm:$0x1] 0.0
          %437 = vst [vmem:[#allocation4] sm:$0xff] 0.0
          %438 = vst [vmem:[#allocation4 + $0x8] sm:$0xff] 0.0
          %439 = vst [vmem:[#allocation4 + $0x10] sm:$0xff] 0.0
          %440 = vst [vmem:[#allocation4 + $0x18] sm:$0xff] 0.0
        $region64: #{tpu_custom_call.1} parent=51 // pred_fallthru
          _
        %v441 = vld [vmem:[%s428] sm:$0xf]
        %v442 = vld [vmem:[%s428 + $0x4] sm:$0xf]
        %v443 = vld [vmem:[#allocation5] sm:$0xf]
        %v444 = vld [vmem:[%s2] sm:$0x1]
        %v446 = vlaneseq
        %v447 = vshrl.u32 %v446, 7
        %v448 = vsub.s32 0, %v447
        %v449 = vrot.slane %v444, %v448
        %v453 = vunpack.c.l.b16 %v441
        %v454 = vunpack.c.l.b16 %v442
        %v455 = vpack.c.b16 %v454, %v453
        %vm456 = vcmask 64512
        %v458 = vsel %vm456, %v455, 0
        %vm460 = vcmask 1043456
        %v462 = vsel %vm460, %v443, 0
        %464 = vmatprep.subr.bf16.mxu0 0
        %465 = vmatpush1.bf16.msra.mxu0 %v462
        %466 = vmatprep.subr.bf16.mxu0 0
        %467 = vmatpush1.bf16.msra.mxu0 0
        %468 = vmatprep.subr.bf16.mxu0 0
        %469 = vmatpush1.bf16.msra.mxu0 0
        %470 = vmatprep.subr.bf16.mxu0 0
        %471 = vmatpush1.bf16.msra.mxu0 0
        %472 = vmatprep.subr.bf16.mxu0 0
        %473 = vmatpush1.bf16.msra.mxu0 0
        %474 = vmatprep.subr.bf16.mxu0 0
        %475 = vmatpush1.bf16.msra.mxu0 0
        %476 = vmatprep.subr.bf16.mxu0 0
        %477 = vmatpush1.bf16.msra.mxu0 0
        %478 = vmatprep.subr.bf16.mxu0 0
        %479 = vmatpush1.bf16.msra.mxu0 0
        %480 = vmatprep.subr.bf16.mxu0 0
        %481 = vmatpush1.bf16.msra.mxu0 0
        %482 = vmatprep.subr.bf16.mxu0 0
        %483 = vmatpush1.bf16.msra.mxu0 0
        %484 = vmatprep.subr.bf16.mxu0 0
        %485 = vmatpush1.bf16.msra.mxu0 0
        %486 = vmatprep.subr.bf16.mxu0 0
        %487 = vmatpush1.bf16.msra.mxu0 0
        %488 = vmatprep.subr.bf16.mxu0 0
        %489 = vmatpush1.bf16.msra.mxu0 0
        %490 = vmatprep.subr.bf16.mxu0 0
        %491 = vmatpush1.bf16.msra.mxu0 0
        %492 = vmatprep.subr.bf16.mxu0 0
        %493 = vmatpush1.bf16.msra.mxu0 0
        %494 = vmatprep.subr.bf16.mxu0 0
        %495 = vmatpush1.bf16.msra.mxu0 0
        %496 = vmatprep.mubr.bf16.mxu0 0
        %497 = vmatmul.mubr.bf16.gmra.mrb[0].mxu0 %v458
        %v498 = vpop.f32.mrb[0].mxu0
        %v499 = vadd.f32 %v449, %v498
        %v500 = vpop.f32.mrb[0].mxu0
        %v501 = vpop.f32.mrb[0].mxu0
        %v502 = vadd.f32 %v449, %v501
        %v503 = vpop.f32.mrb[0].mxu0
        %504 = vdwg.mxu0
        %v505 = vpack.c.bf16 %v502, %v499
        %v506 = vld [vmem:[%s3] sm:$0xff]
        %v507 = vld [vmem:[%s3 + $0x8] sm:$0xff]
        %v508 = vld [vmem:[%s3 + $0x10] sm:$0xff]
        %v509 = vld [vmem:[%s3 + $0x18] sm:$0xff]
        %v510 = vld [vmem:[%s4] sm:$0x3]
        %v512 = vlaneseq
        %v513 = vshrl.u32 %v512, 7
        %v514 = vsub.s32 0, %v513
        %v515 = vrot.slane %v510, %v514
        %v516 = vlaneseq
        %v517 = vshrl.u32 %v516, 7
        %v518 = vsub.s32 1, %v517
        %v519 = vrot.slane %v510, %v518
        %v526 = vunpack.c.l.b16 %v506
        %v527 = vunpack.c.h.b16 %v506
        %v528 = vunpack.c.l.b16 %v507
        %v529 = vunpack.c.h.b16 %v507
        %v530 = vunpack.c.l.b16 %v508
        %v531 = vunpack.c.h.b16 %v508
        %v532 = vunpack.c.l.b16 %v509
        %v533 = vunpack.c.h.b16 %v509
        %v534 = vpack.c.b16 %v528, %v526
        %v535 = vpack.c.b16 %v529, %v527
        %v536 = vpack.c.b16 %v532, %v530
        %v537 = vpack.c.b16 %v533, %v531
        %vm542 = vcmask 261120
        %v544 = vsel %vm542, %v505, 0
        %546 = vmatprep.subr.bf16.mxu0 %v535
        %547 = vmatpush1.bf16.msra.mxu0 %v534
        %548 = vmatprep.subr.bf16.mxu0 %v537
        %549 = vmatpush1.bf16.msra.mxu0 %v536
        %550 = vmatprep.subr.bf16.mxu0 0
        %551 = vmatpush1.bf16.msra.mxu0 0
        %552 = vmatprep.subr.bf16.mxu0 0
        %553 = vmatpush1.bf16.msra.mxu0 0
        %554 = vmatprep.subr.bf16.mxu0 0
        %555 = vmatpush1.bf16.msra.mxu0 0
        %556 = vmatprep.subr.bf16.mxu0 0
        %557 = vmatpush1.bf16.msra.mxu0 0
        %558 = vmatprep.subr.bf16.mxu0 0
        %559 = vmatpush1.bf16.msra.mxu0 0
        %560 = vmatprep.subr.bf16.mxu0 0
        %561 = vmatpush1.bf16.msra.mxu0 0
        %562 = vmatprep.subr.bf16.mxu0 0
        %563 = vmatpush1.bf16.msra.mxu0 0
        %564 = vmatprep.subr.bf16.mxu0 0
        %565 = vmatpush1.bf16.msra.mxu0 0
        %566 = vmatprep.subr.bf16.mxu0 0
        %567 = vmatpush1.bf16.msra.mxu0 0
        %568 = vmatprep.subr.bf16.mxu0 0
        %569 = vmatpush1.bf16.msra.mxu0 0
        %570 = vmatprep.subr.bf16.mxu0 0
        %571 = vmatpush1.bf16.msra.mxu0 0
        %572 = vmatprep.subr.bf16.mxu0 0
        %573 = vmatpush1.bf16.msra.mxu0 0
        %574 = vmatprep.subr.bf16.mxu0 0
        %575 = vmatpush1.bf16.msra.mxu0 0
        %576 = vmatprep.subr.bf16.mxu0 0
        %577 = vmatpush1.bf16.msra.mxu0 0
        %578 = vmatprep.mubr.bf16.mxu0 0
        %579 = vmatmul.mubr.bf16.gmra.mrb[0].mxu0 %v544
        %v580 = vpop.f32.mrb[0].mxu0
        %v581 = vadd.f32 %v515, %v580
        %v582 = vpop.f32.mrb[0].mxu0
        %v583 = vadd.f32 %v519, %v582
        %v584 = vpop.f32.mrb[0].mxu0
        %v585 = vadd.f32 %v515, %v584
        %v586 = vpop.f32.mrb[0].mxu0
        %v587 = vadd.f32 %v519, %v586
        %588 = vdwg.mxu0
        %v589 = vmax.f32 %v583, -0.4
        %v590 = vmax.f32 %v587, -0.4
        %v591 = vmin.f32 %v589, 0.4
        %v592 = vmin.f32 %v590, 0.4
        %v593 = vadd.f32 %v591, 0.5
        %v594 = vadd.f32 %v592, 0.5
        %v595 = vrcp.pop %v593
        %v596 = vrcp.pop %v594
        %v597 = vld [vmem:[%s5] sm:$0x3]
        %vm598 = vcmask 15360
        %v600 = vsel %vm598, %v595, 0
        %v603 = vsel %vm598, %v596, 0
        %vm605 = vcmask 1041408
        %v607 = vsel %vm605, %v597, 0
        %609 = vmatprep.subr.mxu0 0.0
        %610 = vmatpush1.msra.mxu0 %v607
        %611 = vmatprep.subr.mxu0 0.0
        %612 = vmatpush1.msra.mxu0 0.0
        %613 = vmatprep.subr.mxu0 0.0
        %614 = vmatpush1.msra.mxu0 0.0
        %615 = vmatprep.subr.mxu0 0.0
        %616 = vmatpush1.msra.mxu0 0.0
        %617 = vmatprep.subr.mxu0 0.0
        %618 = vmatpush1.msra.mxu0 0.0
        %619 = vmatprep.subr.mxu0 0.0
        %620 = vmatpush1.msra.mxu0 0.0
        %621 = vmatprep.subr.mxu0 0.0
        %622 = vmatpush1.msra.mxu0 0.0
        %623 = vmatprep.subr.mxu0 0.0
        %624 = vmatpush1.msra.mxu0 0.0
        %625 = vmatprep.subr.mxu0 0.0
        %626 = vmatpush1.msra.mxu0 0.0
        %627 = vmatprep.subr.mxu0 0.0
        %628 = vmatpush1.msra.mxu0 0.0
        %629 = vmatprep.subr.mxu0 0.0
        %630 = vmatpush1.msra.mxu0 0.0
        %631 = vmatprep.subr.mxu0 0.0
        %632 = vmatpush1.msra.mxu0 0.0
        %633 = vmatprep.subr.mxu0 0.0
        %634 = vmatpush1.msra.mxu0 0.0
        %635 = vmatprep.subr.mxu0 0.0
        %636 = vmatpush1.msra.mxu0 0.0
        %637 = vmatprep.subr.mxu0 0.0
        %638 = vmatpush1.msra.mxu0 0.0
        %639 = vmatprep.subr.mxu0 0.0
        %640 = vmatpush1.msra.mxu0 0.0
        %641 = vmatprep.subr.mxu0 0.0
        %642 = vmatpush1.msra.mxu0 0.0
        %643 = vmatprep.subr.mxu0 0.0
        %644 = vmatpush1.msra.mxu0 0.0
        %645 = vmatprep.subr.mxu0 0.0
        %646 = vmatpush1.msra.mxu0 0.0
        %647 = vmatprep.subr.mxu0 0.0
        %648 = vmatpush1.msra.mxu0 0.0
        %649 = vmatprep.subr.mxu0 0.0
        %650 = vmatpush1.msra.mxu0 0.0
        %651 = vmatprep.subr.mxu0 0.0
        %652 = vmatpush1.msra.mxu0 0.0
        %653 = vmatprep.subr.mxu0 0.0
        %654 = vmatpush1.msra.mxu0 0.0
        %655 = vmatprep.subr.mxu0 0.0
        %656 = vmatpush1.msra.mxu0 0.0
        %657 = vmatprep.subr.mxu0 0.0
        %658 = vmatpush1.msra.mxu0 0.0
        %659 = vmatprep.subr.mxu0 0.0
        %660 = vmatpush1.msra.mxu0 0.0
        %661 = vmatprep.subr.mxu0 0.0
        %662 = vmatpush1.msra.mxu0 0.0
        %663 = vmatprep.subr.mxu0 0.0
        %664 = vmatpush1.msra.mxu0 0.0
        %665 = vmatprep.subr.mxu0 0.0
        %666 = vmatpush1.msra.mxu0 0.0
        %667 = vmatprep.subr.mxu0 0.0
        %668 = vmatpush1.msra.mxu0 0.0
        %669 = vmatprep.subr.mxu0 0.0
        %670 = vmatpush1.msra.mxu0 0.0
        %671 = vmatprep.subr.mxu0 0.0
        %672 = vmatpush1.msra.mxu0 0.0
        %673 = vmatprep.mubr.f32.mxu0 0.0
        %674 = vmatmul.mubr.f32.gmra.mrb[0].mxu0 %v600
        %v675 = vpop.f32.mrb[0].mxu0
        %v676 = vadd.f32 0.0, %v675
        %v677 = vpop.f32.mrb[0].mxu0
        %678 = vmatprep.mubr.f32.mxu0 0.0
        %679 = vmatmul.mubr.f32.gmra.mrb[0].mxu0 %v603
        %v680 = vpop.f32.mrb[0].mxu0
        %v681 = vadd.f32 0.0, %v680
        %v682 = vpop.f32.mrb[0].mxu0
        %683 = vdwg.mxu0
        %v684 = vmul.f32 %v581, %v676
        %v685 = vmul.f32 %v585, %v681
        %v686 = vlaneseq
        %v687 = vshrl.u32 %v686, 7
        %v688 = vadd.s32 %v687, 8
        %s689 = smul.u32 %s35, 16
        %v690 = vstv %s689
        %v691 = vadd.s32 %v687, %v690
        %v692 = vadd.s32 %v688, %v690
        %vm693 = vcmp.lt.s32.totalorder %v691, 20
        %vm694 = vcmp.lt.s32.totalorder %v692, 20
        %v695 = vsel %vm693, %v684, -1e+30
        %v696 = vsel %vm694, %v685, -1e+30
        %v697 = vld [vmem:[#allocation2] sm:$0x1]
        %v698 = vmax.f32 %v695, %v696
        %v699 = vrot.slane %v698, 4
        %v700 = vmax.f32 %v698, %v699
        %v701 = vrot.slane %v700, 2
        %v702 = vmax.f32 %v700, %v701
        %v703 = vrot.slane %v702, 1
        %v704 = vmax.f32 %v702, %v703
        %v705 = vmax.f32 %v697, %v704
        %v706 = vsub.f32 %v697, %v705
        %v707 = vmul.f32 %v706, 1.442695
        %v708 = vpow.pop %v707
        %v710 = vlaneseq
        %v711 = vshrl.u32 %v710, 7
        %v712 = vsub.s32 0, %v711
        %v713 = vrot.slane %v705, %v712
        %v715 = vsub.f32 %v695, %v713
        %v716 = vsub.f32 %v696, %v713
        %v717 = vmul.f32 %v715, 1.442695
        %v718 = vpow.pop %v717
        %v719 = vmul.f32 %v716, 1.442695
        %v720 = vpow.pop %v719
        %v721 = vsel %vm693, %v718, 0.0
        %v722 = vsel %vm694, %v720, 0.0
        %v723 = vld [vmem:[#allocation3] sm:$0x1]
        %v724 = vmul.f32 %v708, %v723
        %v725 = vadd.f32 %v721, %v722
        %v726 = vrot.slane %v725, 4
        %v727 = vadd.f32 %v725, %v726
        %v728 = vrot.slane %v727, 2
        %v729 = vadd.f32 %v727, %v728
        %v730 = vrot.slane %v729, 1
        %v731 = vadd.f32 %v729, %v730
        %v732 = vadd.f32 %v724, %v731
        %733 = vst [vmem:[#allocation3] sm:$0x1] %v732
        %v734 = vld [vmem:[#allocation4] sm:$0xff]
        %v735 = vld [vmem:[#allocation4 + $0x8] sm:$0xff]
        %v736 = vld [vmem:[#allocation4 + $0x10] sm:$0xff]
        %v737 = vld [vmem:[#allocation4 + $0x18] sm:$0xff]
        %v739 = vlaneseq
        %v740 = vshrl.u32 %v739, 7
        %v741 = vsub.s32 0, %v740
        %v742 = vrot.slane %v708, %v741
        %v744 = vmul.f32 %v742, %v734
        %v745 = vmul.f32 %v742, %v735
        %v746 = vmul.f32 %v742, %v736
        %v747 = vmul.f32 %v742, %v737
        %v748 = vpack.c.bf16 %v722, %v721
        %749 = vxpose.xlu0.c.b16.start [1/8] %v505, 128
        %750 = vxpose.xlu0.c.b16.cont [2/8] 0, 128
        %751 = vxpose.xlu0.c.b16.cont [3/8] 0, 128
        %752 = vxpose.xlu0.c.b16.cont [4/8] 0, 128
        %753 = vxpose.xlu0.c.b16.cont [5/8] 0, 128
        %754 = vxpose.xlu0.c.b16.cont [6/8] 0, 128
        %755 = vxpose.xlu0.c.b16.cont [7/8] 0, 128
        %756 = vxpose.xlu0.c.b16.end [8/8] 0, 128
        %v757 = vpop.trf.xlu0
        %v758 = vpop.trf.xlu0
        %v759 = vpop.trf.xlu0
        %v760 = vpop.trf.xlu0
        %v761 = vpop.trf.xlu0
        %v762 = vpop.trf.xlu0
        %v763 = vpop.trf.xlu0
        %v764 = vpop.trf.xlu0
        %vm765 = vcmask 130048
        %v767 = vsel %vm765, %v757, 0
        %v770 = vsel %vm765, %v758, 0
        %772 = vmatprep.subr.bf16.mxu0 0
        %773 = vmatpush1.bf16.msra.mxu0 %v748
        %774 = vmatprep.subr.bf16.mxu0 0
        %775 = vmatpush1.bf16.msra.mxu0 0
        %776 = vmatprep.subr.bf16.mxu0 0
        %777 = vmatpush1.bf16.msra.mxu0 0
        %778 = vmatprep.subr.bf16.mxu0 0
        %779 = vmatpush1.bf16.msra.mxu0 0
        %780 = vmatprep.subr.bf16.mxu0 0
        %781 = vmatpush1.bf16.msra.mxu0 0
        %782 = vmatprep.subr.bf16.mxu0 0
        %783 = vmatpush1.bf16.msra.mxu0 0
        %784 = vmatprep.subr.bf16.mxu0 0
        %785 = vmatpush1.bf16.msra.mxu0 0
        %786 = vmatprep.subr.bf16.mxu0 0
        %787 = vmatpush1.bf16.msra.mxu0 0
        %788 = vmatprep.subr.bf16.mxu0 0
        %789 = vmatpush1.bf16.msra.mxu0 0
        %790 = vmatprep.subr.bf16.mxu0 0
        %791 = vmatpush1.bf16.msra.mxu0 0
        %792 = vmatprep.subr.bf16.mxu0 0
        %793 = vmatpush1.bf16.msra.mxu0 0
        %794 = vmatprep.subr.bf16.mxu0 0
        %795 = vmatpush1.bf16.msra.mxu0 0
        %796 = vmatprep.subr.bf16.mxu0 0
        %797 = vmatpush1.bf16.msra.mxu0 0
        %798 = vmatprep.subr.bf16.mxu0 0
        %799 = vmatpush1.bf16.msra.mxu0 0
        %800 = vmatprep.subr.bf16.mxu0 0
        %801 = vmatpush1.bf16.msra.mxu0 0
        %802 = vmatprep.subr.bf16.mxu0 0
        %803 = vmatpush1.bf16.msra.mxu0 0
        %804 = vmatprep.mubr.bf16.mxu0 0
        %805 = vmatmul.mubr.bf16.gmra.mrb[0].mxu0 %v767
        %v806 = vpop.f32.mrb[0].mxu0
        %v807 = vadd.f32 0.0, %v806
        %v808 = vpop.f32.mrb[0].mxu0
        %v809 = vpop.f32.mrb[0].mxu0
        %v810 = vadd.f32 0.0, %v809
        %v811 = vpop.f32.mrb[0].mxu0
        %812 = vmatprep.mubr.bf16.mxu0 0
        %813 = vmatmul.mubr.bf16.gmra.mrb[0].mxu0 %v770
        %v814 = vpop.f32.mrb[0].mxu0
        %v815 = vadd.f32 0.0, %v814
        %v816 = vpop.f32.mrb[0].mxu0
        %v817 = vpop.f32.mrb[0].mxu0
        %v818 = vadd.f32 0.0, %v817
        %v819 = vpop.f32.mrb[0].mxu0
        %820 = vdwg.mxu0
        %v821 = vadd.f32 %v744, %v807
        %v822 = vadd.f32 %v745, %v810
        %v823 = vadd.f32 %v746, %v815
        %v824 = vadd.f32 %v747, %v818
        %825 = vst [vmem:[#allocation4] sm:$0xff] %v821
        %826 = vst [vmem:[#allocation4 + $0x8] sm:$0xff] %v822
        %827 = vst [vmem:[#allocation4 + $0x10] sm:$0xff] %v823
        %828 = vst [vmem:[#allocation4 + $0x18] sm:$0xff] %v824
        %829 = vst [vmem:[#allocation2] sm:$0x1] %v705
        %p830 = scmp.eq.s32.totalorder %s35, 1
        // Predicated region
        $region65: #{tpu_custom_call.1} parent=51 // pred_check
          %p831 = pneg %p830
        $region66: #{tpu_custom_call.1} parent=51 // pred_check_branch
          %833 = sbr.rel (%p831) target = $region68
        $region67: #{tpu_custom_call.1} parent=51 // pred_region
          %v834 = vld [vmem:[#allocation3] sm:$0x1]
          %v835 = vmul.f32 %v834, 1.00001
          %v836 = vrcp.pop %v835
          %v837 = vld [vmem:[#allocation4] sm:$0xff]
          %v838 = vld [vmem:[#allocation4 + $0x8] sm:$0xff]
          %v839 = vld [vmem:[#allocation4 + $0x10] sm:$0xff]
          %v840 = vld [vmem:[#allocation4 + $0x18] sm:$0xff]
          %v842 = vlaneseq
          %v843 = vshrl.u32 %v842, 7
          %v844 = vsub.s32 0, %v843
          %v845 = vrot.slane %v836, %v844
          %v847 = vmul.f32 %v837, %v845
          %v848 = vmul.f32 %v838, %v845
          %v849 = vmul.f32 %v839, %v845
          %v850 = vmul.f32 %v840, %v845
          %v851 = vld [vmem:[#allocation8] sm:$0xff]
          %v852 = vld [vmem:[#allocation8 + $0x8] sm:$0xff]
          %v853 = vld [vmem:[#allocation8 + $0x10] sm:$0xff]
          %v854 = vld [vmem:[#allocation8 + $0x18] sm:$0xff]
          %v855 = vmul.f32 %v847, %v851
          %v856 = vmul.f32 %v848, %v852
          %v857 = vmul.f32 %v849, %v853
          %v858 = vmul.f32 %v850, %v854
          %v859 = vpack.c.bf16 %v856, %v855
          %v860 = vpack.c.bf16 %v858, %v857
          %v861 = vld [vmem:[%s7] sm:$0xf]
          %v862 = vld [vmem:[%s7 + $0x4] sm:$0xf]
          %v863 = vld [vmem:[%s7 + $0x8] sm:$0xf]
          %v864 = vld [vmem:[%s7 + $0xc] sm:$0xf]
          %865 = vxpose.xlu0.c.b16.start [1/8] %v859, 128
          %866 = vxpose.xlu0.c.b16.cont [2/8] %v860, 128
          %867 = vxpose.xlu0.c.b16.cont [3/8] 0, 128
          %868 = vxpose.xlu0.c.b16.cont [4/8] 0, 128
          %869 = vxpose.xlu0.c.b16.cont [5/8] 0, 128
          %870 = vxpose.xlu0.c.b16.cont [6/8] 0, 128
          %871 = vxpose.xlu0.c.b16.cont [7/8] 0, 128
          %872 = vxpose.xlu0.c.b16.end [8/8] 0, 128
          %v873 = vpop.trf.xlu0
          %v874 = vpop.trf.xlu0
          %v875 = vpop.trf.xlu0
          %v876 = vpop.trf.xlu0
          %v877 = vpop.trf.xlu0
          %v878 = vpop.trf.xlu0
          %v879 = vpop.trf.xlu0
          %v880 = vpop.trf.xlu0
          %v885 = vunpack.c.l.b16 %v861
          %v886 = vunpack.c.l.b16 %v862
          %v887 = vunpack.c.l.b16 %v863
          %v888 = vunpack.c.l.b16 %v864
          %v889 = vpack.c.b16 %v886, %v885
          %v890 = vpack.c.b16 %v888, %v887
          %v894 = vsel %vm542, %v873, 0
          %v897 = vsel %vm542, %v874, 0
          %v900 = vsel %vm542, %v875, 0
          %v903 = vsel %vm542, %v876, 0
          %v906 = vsel %vm542, %v877, 0
          %v909 = vsel %vm542, %v878, 0
          %v912 = vsel %vm542, %v879, 0
          %v915 = vsel %vm542, %v880, 0
          %917 = vmatprep.subr.bf16.mxu0 0
          %918 = vmatpush1.bf16.msra.mxu0 %v889
          %919 = vmatprep.subr.bf16.mxu0 0
          %920 = vmatpush1.bf16.msra.mxu0 %v890
          %921 = vmatprep.subr.bf16.mxu0 0
          %922 = vmatpush1.bf16.msra.mxu0 0
          %923 = vmatprep.subr.bf16.mxu0 0
          %924 = vmatpush1.bf16.msra.mxu0 0
          %925 = vmatprep.subr.bf16.mxu0 0
          %926 = vmatpush1.bf16.msra.mxu0 0
          %927 = vmatprep.subr.bf16.mxu0 0
          %928 = vmatpush1.bf16.msra.mxu0 0
          %929 = vmatprep.subr.bf16.mxu0 0
          %930 = vmatpush1.bf16.msra.mxu0 0
          %931 = vmatprep.subr.bf16.mxu0 0
          %932 = vmatpush1.bf16.msra.mxu0 0
          %933 = vmatprep.subr.bf16.mxu0 0
          %934 = vmatpush1.bf16.msra.mxu0 0
          %935 = vmatprep.subr.bf16.mxu0 0
          %936 = vmatpush1.bf16.msra.mxu0 0
          %937 = vmatprep.subr.bf16.mxu0 0
          %938 = vmatpush1.bf16.msra.mxu0 0
          %939 = vmatprep.subr.bf16.mxu0 0
          %940 = vmatpush1.bf16.msra.mxu0 0
          %941 = vmatprep.subr.bf16.mxu0 0
          %942 = vmatpush1.bf16.msra.mxu0 0
          %943 = vmatprep.subr.bf16.mxu0 0
          %944 = vmatpush1.bf16.msra.mxu0 0
          %945 = vmatprep.subr.bf16.mxu0 0
          %946 = vmatpush1.bf16.msra.mxu0 0
          %947 = vmatprep.subr.bf16.mxu0 0
          %948 = vmatpush1.bf16.msra.mxu0 0
          %949 = vmatprep.mubr.bf16.mxu0 0
          %950 = vmatmul.mubr.bf16.gmra.mrb[0].mxu0 %v894
          %v951 = vpop.f32.mrb[0].mxu0
          %v952 = vadd.f32 0.0, %v951
          %v953 = vpop.f32.mrb[0].mxu0
          %v954 = vpop.f32.mrb[0].mxu0
          %v955 = vadd.f32 0.0, %v954
          %v956 = vpop.f32.mrb[0].mxu0
          %957 = vmatprep.mubr.bf16.mxu0 0
          %958 = vmatmul.mubr.bf16.gmra.mrb[0].mxu0 %v897
          %v959 = vpop.f32.mrb[0].mxu0
          %v960 = vadd.f32 0.0, %v959
          %v961 = vpop.f32.mrb[0].mxu0
          %v962 = vpop.f32.mrb[0].mxu0
          %v963 = vadd.f32 0.0, %v962
          %v964 = vpop.f32.mrb[0].mxu0
          %965 = vmatprep.mubr.bf16.mxu0 0
          %966 = vmatmul.mubr.bf16.gmra.mrb[0].mxu0 %v900
          %v967 = vpop.f32.mrb[0].mxu0
          %v968 = vadd.f32 0.0, %v967
          %v969 = vpop.f32.mrb[0].mxu0
          %v970 = vpop.f32.mrb[0].mxu0
          %v971 = vadd.f32 0.0, %v970
          %v972 = vpop.f32.mrb[0].mxu0
          %973 = vmatprep.mubr.bf16.mxu0 0
          %974 = vmatmul.mubr.bf16.gmra.mrb[0].mxu0 %v903
          %v975 = vpop.f32.mrb[0].mxu0
          %v976 = vadd.f32 0.0, %v975
          %v977 = vpop.f32.mrb[0].mxu0
          %v978 = vpop.f32.mrb[0].mxu0
          %v979 = vadd.f32 0.0, %v978
          %v980 = vpop.f32.mrb[0].mxu0
          %981 = vmatprep.mubr.bf16.mxu0 0
          %982 = vmatmul.mubr.bf16.gmra.mrb[0].mxu0 %v906
          %v983 = vpop.f32.mrb[0].mxu0
          %v984 = vadd.f32 0.0, %v983
          %v985 = vpop.f32.mrb[0].mxu0
          %v986 = vpop.f32.mrb[0].mxu0
          %v987 = vadd.f32 0.0, %v986
          %v988 = vpop.f32.mrb[0].mxu0
          %989 = vmatprep.mubr.bf16.mxu0 0
          %990 = vmatmul.mubr.bf16.gmra.mrb[0].mxu0 %v909
          %v991 = vpop.f32.mrb[0].mxu0
          %v992 = vadd.f32 0.0, %v991
          %v993 = vpop.f32.mrb[0].mxu0
          %v994 = vpop.f32.mrb[0].mxu0
          %v995 = vadd.f32 0.0, %v994
          %v996 = vpop.f32.mrb[0].mxu0
          %997 = vmatprep.mubr.bf16.mxu0 0
          %998 = vmatmul.mubr.bf16.gmra.mrb[0].mxu0 %v912
          %v999 = vpop.f32.mrb[0].mxu0
          %v1000 = vadd.f32 0.0, %v999
          %v1001 = vpop.f32.mrb[0].mxu0
          %v1002 = vpop.f32.mrb[0].mxu0
          %v1003 = vadd.f32 0.0, %v1002
          %v1004 = vpop.f32.mrb[0].mxu0
          %1005 = vmatprep.mubr.bf16.mxu0 0
          %1006 = vmatmul.mubr.bf16.gmra.mrb[0].mxu0 %v915
          %v1007 = vpop.f32.mrb[0].mxu0
          %v1008 = vadd.f32 0.0, %v1007
          %v1009 = vpop.f32.mrb[0].mxu0
          %v1010 = vpop.f32.mrb[0].mxu0
          %v1011 = vadd.f32 0.0, %v1010
          %v1012 = vpop.f32.mrb[0].mxu0
          %1013 = vdwg.mxu0
          %v1014 = vpack.c.bf16 %v955, %v952
          %v1015 = vpack.c.bf16 %v963, %v960
          %v1016 = vpack.c.bf16 %v971, %v968
          %v1017 = vpack.c.bf16 %v979, %v976
          %v1018 = vpack.c.bf16 %v987, %v984
          %v1019 = vpack.c.bf16 %v995, %v992
          %v1020 = vpack.c.bf16 %v1003, %v1000
          %v1021 = vpack.c.bf16 %v1011, %v1008
          %v1030 = vunpack.c.l.b16 %v1014
          %v1031 = vunpack.c.h.b16 %v1014
          %v1032 = vunpack.c.l.b16 %v1015
          %v1033 = vunpack.c.h.b16 %v1015
          %v1034 = vunpack.c.l.b16 %v1016
          %v1035 = vunpack.c.h.b16 %v1016
          %v1036 = vunpack.c.l.b16 %v1017
          %v1037 = vunpack.c.h.b16 %v1017
          %v1038 = vunpack.c.l.b16 %v1018
          %v1039 = vunpack.c.h.b16 %v1018
          %v1040 = vunpack.c.l.b16 %v1019
          %v1041 = vunpack.c.h.b16 %v1019
          %v1042 = vunpack.c.l.b16 %v1020
          %v1043 = vunpack.c.h.b16 %v1020
          %v1044 = vunpack.c.l.b16 %v1021
          %v1045 = vunpack.c.h.b16 %v1021
          %v1046 = vpack.c.b16 %v1030, %v1030
          %v1047 = vpack.c.b16 %v1031, %v1031
          %v1048 = vpack.c.b16 %v1032, %v1032
          %v1049 = vpack.c.b16 %v1033, %v1033
          %v1050 = vpack.c.b16 %v1034, %v1034
          %v1051 = vpack.c.b16 %v1035, %v1035
          %v1052 = vpack.c.b16 %v1036, %v1036
          %v1053 = vpack.c.b16 %v1037, %v1037
          %v1054 = vpack.c.b16 %v1038, %v1038
          %v1055 = vpack.c.b16 %v1039, %v1039
          %v1056 = vpack.c.b16 %v1040, %v1040
          %v1057 = vpack.c.b16 %v1041, %v1041
          %v1058 = vpack.c.b16 %v1042, %v1042
          %v1059 = vpack.c.b16 %v1043, %v1043
          %v1060 = vpack.c.b16 %v1044, %v1044
          %v1061 = vpack.c.b16 %v1045, %v1045
          %1078 = vst [vmem:[%s419] sm:$0xf] %v1046
          %1079 = vst [vmem:[%s419 + $0x4] sm:$0xf] %v1047
          %1080 = vst [vmem:[%s419 + $0x8] sm:$0xf] %v1048
          %1081 = vst [vmem:[%s419 + $0xc] sm:$0xf] %v1049
          %1082 = vst [vmem:[%s419 + $0x10] sm:$0xf] %v1050
          %1083 = vst [vmem:[%s419 + $0x14] sm:$0xf] %v1051
          %1084 = vst [vmem:[%s419 + $0x18] sm:$0xf] %v1052
          %1085 = vst [vmem:[%s419 + $0x1c] sm:$0xf] %v1053
          %1086 = vst [vmem:[%s419 + $0x20] sm:$0xf] %v1054
          %1087 = vst [vmem:[%s419 + $0x24] sm:$0xf] %v1055
          %1088 = vst [vmem:[%s419 + $0x28] sm:$0xf] %v1056
          %1089 = vst [vmem:[%s419 + $0x2c] sm:$0xf] %v1057
          %1090 = vst [vmem:[%s419 + $0x30] sm:$0xf] %v1058
          %1091 = vst [vmem:[%s419 + $0x34] sm:$0xf] %v1059
          %1092 = vst [vmem:[%s419 + $0x38] sm:$0xf] %v1060
          %1093 = vst [vmem:[%s419 + $0x3c] sm:$0xf] %v1061
          %v1094 = vld [vmem:[#allocation2] sm:$0x1]
          %1095 = vst [vmem:[%s406] sm:$0x1] %v1094
          %v1096 = vld [vmem:[#allocation3] sm:$0x1]
          %1097 = vst [vmem:[%s412] sm:$0x1] %v1096
        $region68: #{tpu_custom_call.1} parent=51 // pred_fallthru
          _
        %s1098 = sand.u32 %s225, 1
        %s1099 = scalar_lea.sflag [#allocation7], %s1098
        %s1100 = sand.u32 %s225, 1
        %s1101 = scalar_lea.vmem [#allocation10], %s1100
        %s1102 = sand.u32 %s30, 1
        %s1103 = scalar_lea.sflag [#allocation12], %s1102
        %s1104 = sand.u32 %s251, 1
        %s1105 = scalar_lea.vmem [#allocation11], %s1104
        %s1106 = sand.u32 %s30, 1
        %s1107 = scalar_lea.sflag [#allocation12], %s1106
        %s1108 = sand.u32 %s277, 1
        %s1109 = smul.addr %s1108, 64
        %s1110 = scalar_lea.vmem [#allocation13], %s1109
        // Predicated region
        $region69: #{tpu_custom_call.1} parent=51 // pred_check
          %p1111 = pneg %p235
        $region70: #{tpu_custom_call.1} parent=51 // pred_check_branch
          %1113 = sbr.rel (%p1111) target = $region72
        $region71: #{tpu_custom_call.1} parent=51 // pred_region
          %s1115 = ssub.s32 16, 16
          %1116 = vsyncadd %s1099, %s1115
          %s1117 = smul.addr %s34, 16
          %s1118 = scalar_lea.hbm %s8, %s1117
          %s1120 = sshll.u32 %s1101, 4
          %s1121 = int_to_ptr.vmem [resolvable:$true] %s1120
          %1123 = dma.vmem_to_hbm [thread:$0]  %s1121, 16, %s1118, %s1099
        $region72: #{tpu_custom_call.1} parent=51 // pred_fallthru
          _
        // Predicated region
        $region73: #{tpu_custom_call.1} parent=51 // pred_check
          %p1124 = pneg %p261
        $region74: #{tpu_custom_call.1} parent=51 // pred_check_branch
          %1126 = sbr.rel (%p1124) target = $region76
        $region75: #{tpu_custom_call.1} parent=51 // pred_region
          %s1128 = ssub.s32 16, 16
          %1129 = vsyncadd %s1103, %s1128
          %s1130 = smul.addr %s34, 16
          %s1131 = scalar_lea.hbm %s9, %s1130
          %s1133 = sshll.u32 %s1105, 4
          %s1134 = int_to_ptr.vmem [resolvable:$true] %s1133
          %1136 = dma.vmem_to_hbm [thread:$0]  %s1134, 16, %s1131, %s1103
        $region76: #{tpu_custom_call.1} parent=51 // pred_fallthru
          _
        // Predicated region
        $region77: #{tpu_custom_call.1} parent=51 // pred_check
          %p1137 = pneg %p287
        $region78: #{tpu_custom_call.1} parent=51 // pred_check_branch
          %1139 = sbr.rel (%p1137) target = $region80
        $region79: #{tpu_custom_call.1} parent=51 // pred_region
          %s1141 = ssub.s32 1024, 1024
          %1142 = vsyncadd %s1107, %s1141
          %s1143 = smul.addr %s34, 16
          %s1144 = smul.addr %s1143, 64
          %s1145 = scalar_lea.hbm %s10, %s1144
          %s1146 = sshll.u32 %s1110, 4
          %s1147 = int_to_ptr.vmem [resolvable:$true] %s1146
          %1152 = dma.vmem_to_hbm [thread:$0]  %s1147, 1024, %s1145, %s1107, 64, 64, 4
        $region80: #{tpu_custom_call.1} parent=51 // pred_fallthru
          _
      $region52: #{tpu_custom_call.1} parent=5 // pred_fallthru
        _
      %p1153 = scmp.le.s32.totalorder 2, %s25
      // Predicated region
      $region81: #{tpu_custom_call.1} parent=5 // pred_check
        %p1154 = pneg %p1153
      $region82: #{tpu_custom_call.1} parent=5 // pred_check_branch
        %1156 = sbr.rel (%p1154) target = $region84
      $region83: #{tpu_custom_call.1} parent=5 // pred_region
        %s1157 = ssub.s32 %s25, 2
        // Predicated region
        $region85: #{tpu_custom_call.1} parent=83 // pred_check
          %p1158 = pneg %p241
        $region86: #{tpu_custom_call.1} parent=83 // pred_check_branch
          %1160 = sbr.rel (%p1158) target = $region88
        $region87: #{tpu_custom_call.1} parent=83 // pred_region
          %s1161 = sand.u32 %s226, 1
          %s1162 = scalar_lea.sflag [#allocation7], %s1161
          %s1163 = sand.u32 %s226, 1
          %s1164 = scalar_lea.vmem [#allocation10], %s1163
          %1165 = dma.done %s1162, 16
        $region88: #{tpu_custom_call.1} parent=83 // pred_fallthru
          _
        // Predicated region
        $region89: #{tpu_custom_call.1} parent=83 // pred_check
          %p1166 = pneg %p267
        $region90: #{tpu_custom_call.1} parent=83 // pred_check_branch
          %1168 = sbr.rel (%p1166) target = $region92
        $region91: #{tpu_custom_call.1} parent=83 // pred_region
          %s1169 = sand.u32 %s31, 1
          %s1170 = scalar_lea.sflag [#allocation12], %s1169
          %s1171 = sand.u32 %s252, 1
          %s1172 = scalar_lea.vmem [#allocation11], %s1171
          %1173 = dma.done %s1170, 16
        $region92: #{tpu_custom_call.1} parent=83 // pred_fallthru
          _
        // Predicated region
        $region93: #{tpu_custom_call.1} parent=83 // pred_check
          %p1174 = pneg %p293
        $region94: #{tpu_custom_call.1} parent=83 // pred_check_branch
          %1176 = sbr.rel (%p1174) target = $region96
        $region95: #{tpu_custom_call.1} parent=83 // pred_region
          %s1177 = sand.u32 %s31, 1
          %s1178 = scalar_lea.sflag [#allocation12], %s1177
          %s1179 = sand.u32 %s278, 1
          %s1180 = smul.addr %s1179, 64
          %s1181 = scalar_lea.vmem [#allocation13], %s1180
          %1182 = dma.done %s1178, 1024
        $region96: #{tpu_custom_call.1} parent=83 // pred_fallthru
          _
      $region84: #{tpu_custom_call.1} parent=5 // pred_fallthru
        _
    $region6: #{tpu_custom_call.1} parent=1 // loop_footer
      %s29 = sadd.s32 1, %s25
    $region7: #{tpu_custom_call.1} parent=1 // loop_footer_branch
      %24 = sbr.rel target = $region3
    $region8: #{tpu_custom_call.1} parent=1 // loop_exit
      _
    %1183 = vsyncpa [#allocation6], 1
    %s1184 = scalar_lea.sflag [#allocation6], 1
    %1185 = vsyncpa %s1184, 1
    %1186 = vsyncpa [#allocation9], 1
    %1187 = vsyncpa [#allocation7], 1
    %s1188 = scalar_lea.sflag [#allocation7], 1
    %1189 = vsyncpa %s1188, 1
    %1190 = vsyncpa [#allocation12], 1
    %s1191 = scalar_lea.sflag [#allocation12], 1
    %1192 = vsyncpa %s1191, 1

</llo_original>
